<compile_context>
chip_gen: v6e
topology: v6e:2x2x1
jax: 0.10.0
libtpu: 0.0.40
codegen_flags: <defaults>
</compile_context>

<pallas_src>
from functools import partial

import numpy as np
import jax
import jax.numpy as jnp
from jax import lax
from jax.experimental import pallas as pl
from jax.experimental.pallas import tpu as pltpu

_LANE = 128
_VMEM_LIMIT_BYTES = 32 * 1024 * 1024      # safe on v5e/v6e/v7x; blocks here are tiny
_TARGET_BYTES_PER_STEP = 2 * 1024 * 1024  # fatten steps for small images
_MAX_IMGS_PER_STEP = 8
_MAX_POOL_MAT_BYTES = 4 * 1024 * 1024     # guard for the fused-pool selection matrix
_LEAD = 1                                  # one zero lane ahead of the flattened image


def _pick_images_per_step(n, per_img_bytes):
    """Images per grid step: big enough to amortize per-step overhead, but keep
    >= 2 grid steps when N >= 2 (v7x dual-TC / megacore)."""
    cap = max(1, _TARGET_BYTES_PER_STEP // max(per_img_bytes, 1))
    cap = min(cap, _MAX_IMGS_PER_STEP)
    if n >= 2:
        cap = min(cap, n // 2)
    cap = max(cap, 1)
    nb = 1
    for d in range(1, min(cap, n) + 1):
        if n % d == 0:          # keep the grid exact (no partial batch blocks)
            nb = d
    return nb


def _pool_matrix(h, w):
    """(H*W, Ho*Wo) matrix implementing AvgPool2d(2) (floor mode) on the flat layout."""
    ho, wo = h // 2, w // 2
    p = np.zeros((h * w, ho * wo), np.float32)
    for i in range(ho):
        for j in range(wo):
            col = i * wo + j
            for a in (0, 1):
                for b in (0, 1):
                    p[(2 * i + a) * w + (2 * j + b), col] = 0.25
    return jnp.asarray(p)


def _make_kernel(nb, cout, h, w, fuse_pool):
    """Fused conv3x3 + BN + ReLU [+ AvgPool2d(2)] over `nb` images per grid step.

    x_ref : (nb, Cin, Lin)   row-padded, flattened image + 1 lead zero + tail zeros
    w_ref : (9, Cout, Cin)   BN-scaled conv weights, k = kh*3 + kw
    b_ref : (Cout, 1)        conv bias + BN shift folded (f32)
    p_ref : (H*W, Ho*Wo)     pooling matrix (only when fuse_pool)
    o_ref : (nb, Cout, H*W)  or (nb, Cout, Ho*Wo) when fuse_pool
    """
    hw = h * w

    def kernel(x_ref, w_ref, b_ref, *rest):
        if fuse_pool:
            p_ref, o_ref = rest
        else:
            (o_ref,) = rest

        # column-border masks for the dw = -1 / +1 taps (conv zero padding in W)
        wpos = lax.broadcasted_iota(jnp.int32, (1, hw), 1) % w
        m_left = wpos != 0
        m_right = wpos != (w - 1)
        bias = b_ref[...]

        for i in range(nb):
            acc = jnp.zeros((cout, hw), jnp.float32)
            for kh in range(3):
                for kw in range(3):
                    k = kh * 3 + kw
                    # flat output index q = h*W + w reads input at q + kh*W + (kw-1)
                    start = kh * w + (kw - 1) + _LEAD
                    r = x_ref[i, :, pl.ds(start, hw)]          # (Cin, H*W), x.dtype
                    if kw == 0:
                        r = jnp.where(m_left, r, 0)
                    elif kw == 2:
                        r = jnp.where(m_right, r, 0)
                    acc = acc + jnp.dot(w_ref[k], r,
                                        preferred_element_type=jnp.float32)
            y = jnp.maximum(acc + bias, 0.0)                   # bias/BN shift + ReLU
            if fuse_pool:
                y = jnp.dot(y, p_ref[...], preferred_element_type=jnp.float32)
            o_ref[i] = y.astype(o_ref.dtype)

    return kernel


@partial(jax.jit, static_argnames=("eps", "flagpool"))
def cnn_embed_forward(x, weight, bias, gamma, beta, running_mean, running_var,
                      *, eps=1e-5, flagpool=False):
    """CNNEmbed forward. x: NCHW; returns NCHW (pooled NCH'W' when flagpool)."""
    N, Cin, H, W = x.shape
    Cout, Cin_w, KH, KW = weight.shape
    assert Cin == Cin_w and KH == 3 and KW == 3, "kernel assumes 3x3 conv, pad=1, stride=1"

    # ---- fold BatchNorm (running stats) + conv bias into weights / bias ------
    sbn = gamma.astype(jnp.float32) * lax.rsqrt(running_var.astype(jnp.float32) + eps)
    w_sc = weight.astype(jnp.float32) * sbn[:, None, None, None]          # (Cout,Cin,3,3)
    w9 = jnp.transpose(w_sc, (2, 3, 0, 1)).reshape(KH * KW, Cout, Cin).astype(x.dtype)
    b_fold = (sbn * (bias.astype(jnp.float32) - running_mean.astype(jnp.float32))
              + beta.astype(jnp.float32)).reshape(Cout, 1)                 # (Cout, 1) f32

    # ---- input layout: pad rows (top/bottom), flatten, add 1 lead + tail zeros
    HW = H * W
    rows_flat = (H + 2) * W
    need = rows_flat + _LEAD + 1                     # room for the (kh=2,kw=2) tap
    Lin = pl.cdiv(need, _LANE) * _LANE
    x_rows = jnp.pad(x, ((0, 0), (0, 0), (1, 1), (0, 0))).reshape(N, Cin, rows_flat)
    x_flat = jnp.pad(x_rows, ((0, 0), (0, 0), (_LEAD, Lin - rows_flat - _LEAD)))

    # ---- pooled path setup ----------------------------------------------------
    Ho, Wo = H // 2, W // 2
    HWo = Ho * Wo
    fuse_pool = bool(flagpool) and HWo > 0 and (HW * HWo * 4) <= _MAX_POOL_MAT_BYTES
    out_lanes = HWo if fuse_pool else HW

    per_img_bytes = (Cin * Lin + Cout * out_lanes) * x.dtype.itemsize
    nb = _pick_images_per_step(N, per_img_bytes)
    grid = (N // nb,)

    kernel = _make_kernel(nb, Cout, H, W, fuse_pool)
    in_specs = [
        pl.BlockSpec((nb, Cin, Lin), lambda g: (g, 0, 0)),
        pl.BlockSpec((KH * KW, Cout, Cin), lambda g: (0, 0, 0)),
        pl.BlockSpec((Cout, 1), lambda g: (0, 0)),
    ]
    args = [x_flat, w9, b_fold]
    if fuse_pool:
        in_specs.append(pl.BlockSpec((HW, HWo), lambda g: (0, 0)))
        args.append(_pool_matrix(H, W))

    out = pl.pallas_call(
        kernel,
        out_shape=jax.ShapeDtypeStruct((N, Cout, out_lanes), x.dtype),
        grid_spec=pltpu.PrefetchScalarGridSpec(
            num_scalar_prefetch=0,
            grid=grid,
            in_specs=in_specs,
            out_specs=pl.BlockSpec((nb, Cout, out_lanes), lambda g: (g, 0, 0)),
        ),
        compiler_params=pltpu.CompilerParams(
            dimension_semantics=("parallel",),
            vmem_limit_bytes=_VMEM_LIMIT_BYTES),
    )(*args)

    if flagpool:
        if fuse_pool:
            return out.reshape(N, Cout, Ho, Wo)
        # TODO(synk): very large images fall back to XLA-side AvgPool2d(2).
        y = out.reshape(N, Cout, H, W)
        y = y[:, :, :Ho * 2, :Wo * 2].reshape(N, Cout, Ho, 2, Wo, 2).mean(axis=(3, 5))
        return y.astype(x.dtype)
    return out.reshape(N, Cout, H, W)


def cnn_embed_ref(x, weight, bias, gamma, beta, mean, var, *, eps=1e-5, flagpool=False):
    """Pure-JAX reference (inference-mode BatchNorm)."""
    y = lax.conv_general_dilated(
        x.astype(jnp.float32), weight.astype(jnp.float32),
        window_strides=(1, 1), padding=((1, 1), (1, 1)),
        dimension_numbers=("NCHW", "OIHW", "NCHW"))
    y = y + bias[None, :, None, None]
    scale = gamma * lax.rsqrt(var + eps)
    y = (y - mean[None, :, None, None]) * scale[None, :, None, None] + beta[None, :, None, None]
    y = jnp.maximum(y, 0.0)
    if flagpool:
        Nn, C, H, W = y.shape
        y = y[:, :, :(H // 2) * 2, :(W // 2) * 2].reshape(
            Nn, C, H // 2, 2, W // 2, 2).mean(axis=(3, 5))
    return y.astype(x.dtype)


if __name__ == "__main__":
    key = jax.random.PRNGKey(0)
    kx, kw, kb, kg, kbe, km, kv = jax.random.split(key, 7)

    N, Cin, H, W, Cout = 2, 3, 16, 16, 32
    x = jax.random.normal(kx, (N, Cin, H, W), dtype=jnp.float32)
    weight = 0.1 * jax.random.normal(kw, (Cout, Cin, 3, 3), dtype=jnp.float32)
    bias = 0.1 * jax.random.normal(kb, (Cout,), dtype=jnp.float32)
    gamma = 1.0 + 0.1 * jax.random.normal(kg, (Cout,), dtype=jnp.float32)
    beta = 0.1 * jax.random.normal(kbe, (Cout,), dtype=jnp.float32)
    running_mean = 0.1 * jax.random.normal(km, (Cout,), dtype=jnp.float32)
    running_var = jax.random.uniform(kv, (Cout,), minval=0.5, maxval=1.5, dtype=jnp.float32)

    # default path: conv + BN + ReLU
    y = cnn_embed_forward(x, weight, bias, gamma, beta, running_mean, running_var)
    jax.block_until_ready(y)
    y_ref = cnn_embed_ref(x, weight, bias, gamma, beta, running_mean, running_var)
    assert y.shape == (N, Cout, H, W) and y.dtype == x.dtype
    assert jnp.allclose(y, y_ref, atol=1e-4, rtol=1e-4), float(jnp.max(jnp.abs(y - y_ref)))

    # pooled path: conv + BN + ReLU + AvgPool2d(2), fused in-kernel
    y_p = cnn_embed_forward(x, weight, bias, gamma, beta, running_mean, running_var,
                            flagpool=True)
    jax.block_until_ready(y_p)
    y_p_ref = cnn_embed_ref(x, weight, bias, gamma, beta, running_mean, running_var,
                            flagpool=True)
    assert y_p.shape == (N, Cout, H // 2, W // 2)
    assert jnp.allclose(y_p, y_p_ref, atol=1e-4, rtol=1e-4), float(jnp.max(jnp.abs(y_p - y_p_ref)))

    print("KERNEL_OK")
</pallas_src>

<mosaic_0001>
module attributes {stable_mosaic.version = 11 : i64} {
  func.func @kernel(%arg0: i32, %arg1: memref<1x3x384xf32, #tpu.memory_space<vmem>>, %arg2: memref<9x32x3xf32, #tpu.memory_space<vmem>>, %arg3: memref<32x1xf32, #tpu.memory_space<vmem>>, %arg4: memref<1x32x256xf32, #tpu.memory_space<vmem>>) attributes {dimension_semantics = [#tpu.dimension_semantics<parallel>], iteration_bounds = array<i64: 2>, scalar_prefetch = 0 : i64, scratch_operands = 0 : i64, tpu.core_type = #tpu.core_type<tc>, window_params = [{transform_indices = @transform_0, window_bounds = array<i64: 1, 3, 384>}, {pipeline_mode = #tpu.pipeline_mode<synchronous>, transform_indices = @transform_1, window_bounds = array<i64: 9, 32, 3>}, {pipeline_mode = #tpu.pipeline_mode<synchronous>, transform_indices = @transform_2, window_bounds = array<i64: 32, 1>}, {transform_indices = @transform_3, window_bounds = array<i64: 1, 32, 256>}]} {
    %0 = tpu.iota {dimensions = array<i32: 1>} : vector<1x256xi32>
    %c16_i32 = arith.constant 16 : i32
    %c0_i32 = arith.constant 0 : i32
    %1 = arith.cmpi eq, %c16_i32, %c0_i32 : i32
    %c1_i32 = arith.constant 1 : i32
    %2 = arith.select %1, %c1_i32, %c16_i32 : i32
    %3 = vector.broadcast %2 : i32 to vector<1x256xi32>
    %4 = arith.remsi %0, %3 : vector<1x256xi32>
    %c0_i32_0 = arith.constant 0 : i32
    %5 = vector.broadcast %c0_i32_0 : i32 to vector<1x256xi32>
    %6 = arith.cmpi ne, %4, %5 : vector<1x256xi32>
    %c0_i32_1 = arith.constant 0 : i32
    %7 = vector.broadcast %c0_i32_1 : i32 to vector<1x256xi32>
    %8 = arith.cmpi slt, %4, %7 : vector<1x256xi32>
    %c0_i32_2 = arith.constant 0 : i32
    %9 = arith.cmpi slt, %2, %c0_i32_2 : i32
    %10 = vector.broadcast %9 : i1 to vector<1x256xi1>
    %11 = vector.broadcast %10 : vector<1x256xi1> to vector<1x256xi1>
    %12 = arith.xori %8, %11 : vector<1x256xi1>
    %13 = arith.andi %12, %6 : vector<1x256xi1>
    %14 = vector.broadcast %2 : i32 to vector<1x256xi32>
    %15 = arith.addi %4, %14 : vector<1x256xi32>
    %16 = arith.select %13, %15, %4 : vector<1x256xi1>, vector<1x256xi32>
    %c0_i32_3 = arith.constant 0 : i32
    %17 = vector.broadcast %c0_i32_3 : i32 to vector<1x256xi32>
    %18 = arith.cmpi ne, %16, %17 : vector<1x256xi32>
    %c15_i32 = arith.constant 15 : i32
    %19 = vector.broadcast %c15_i32 : i32 to vector<1x256xi32>
    %20 = arith.cmpi ne, %16, %19 : vector<1x256xi32>
    %c0 = arith.constant 0 : index
    %c0_4 = arith.constant 0 : index
    %21 = vector.load %arg3[%c0, %c0_4] : memref<32x1xf32, #tpu.memory_space<vmem>>, vector<32x1xf32>
    %cst = arith.constant 0.000000e+00 : f32
    %22 = vector.broadcast %cst : f32 to vector<32x256xf32>
    %c0_5 = arith.constant 0 : index
    %c0_6 = arith.constant 0 : index
    %c0_7 = arith.constant 0 : index
    %23 = vector.load %arg1[%c0_5, %c0_6, %c0_7] : memref<1x3x384xf32, #tpu.memory_space<vmem>>, vector<1x3x256xf32>
    %24 = vector.shape_cast %23 : vector<1x3x256xf32> to vector<3x256xf32>
    %c0_i32_8 = arith.constant 0 : i32
    %25 = arith.sitofp %c0_i32_8 : i32 to f32
    %26 = vector.shape_cast %18 : vector<1x256xi1> to vector<1x256xi1>
    %27 = vector.broadcast %26 : vector<1x256xi1> to vector<3x256xi1>
    %28 = vector.broadcast %25 : f32 to vector<3x256xf32>
    %29 = arith.select %27, %24, %28 : vector<3x256xi1>, vector<3x256xf32>
    %c0_9 = arith.constant 0 : index
    %c0_10 = arith.constant 0 : index
    %c0_11 = arith.constant 0 : index
    %30 = vector.load %arg2[%c0_9, %c0_10, %c0_11] : memref<9x32x3xf32, #tpu.memory_space<vmem>>, vector<1x32x3xf32>
    %31 = vector.shape_cast %30 : vector<1x32x3xf32> to vector<32x3xf32>
    %cst_12 = arith.constant dense<0.000000e+00> : vector<32x256xf32>
    %32 = tpu.matmul %31, %29, %cst_12 {dimension_numbers = #tpu.dot_dimension_numbers<[1], [0], [0], [1], [0, 0, 1, 1], [], []>} : vector<32x3xf32>, vector<3x256xf32>, vector<32x256xf32> -> vector<32x256xf32>
    %33 = arith.addf %22, %32 : vector<32x256xf32>
    %c0_13 = arith.constant 0 : index
    %c0_14 = arith.constant 0 : index
    %c1 = arith.constant 1 : index
    %34 = vector.load %arg1[%c0_13, %c0_14, %c1] : memref<1x3x384xf32, #tpu.memory_space<vmem>>, vector<1x3x256xf32>
    %35 = vector.shape_cast %34 : vector<1x3x256xf32> to vector<3x256xf32>
    %c1_15 = arith.constant 1 : index
    %c0_16 = arith.constant 0 : index
    %c0_17 = arith.constant 0 : index
    %36 = vector.load %arg2[%c1_15, %c0_16, %c0_17] : memref<9x32x3xf32, #tpu.memory_space<vmem>>, vector<1x32x3xf32>
    %37 = vector.shape_cast %36 : vector<1x32x3xf32> to vector<32x3xf32>
    %cst_18 = arith.constant dense<0.000000e+00> : vector<32x256xf32>
    %38 = tpu.matmul %37, %35, %cst_18 {dimension_numbers = #tpu.dot_dimension_numbers<[1], [0], [0], [1], [0, 0, 1, 1], [], []>} : vector<32x3xf32>, vector<3x256xf32>, vector<32x256xf32> -> vector<32x256xf32>
    %39 = arith.addf %33, %38 : vector<32x256xf32>
    %c0_19 = arith.constant 0 : index
    %c0_20 = arith.constant 0 : index
    %c2 = arith.constant 2 : index
    %40 = vector.load %arg1[%c0_19, %c0_20, %c2] : memref<1x3x384xf32, #tpu.memory_space<vmem>>, vector<1x3x256xf32>
    %41 = vector.shape_cast %40 : vector<1x3x256xf32> to vector<3x256xf32>
    %c0_i32_21 = arith.constant 0 : i32
    %42 = arith.sitofp %c0_i32_21 : i32 to f32
    %43 = vector.shape_cast %20 : vector<1x256xi1> to vector<1x256xi1>
    %44 = vector.broadcast %43 : vector<1x256xi1> to vector<3x256xi1>
    %45 = vector.broadcast %42 : f32 to vector<3x256xf32>
    %46 = arith.select %44, %41, %45 : vector<3x256xi1>, vector<3x256xf32>
    %c2_22 = arith.constant 2 : index
    %c0_23 = arith.constant 0 : index
    %c0_24 = arith.constant 0 : index
    %47 = vector.load %arg2[%c2_22, %c0_23, %c0_24] : memref<9x32x3xf32, #tpu.memory_space<vmem>>, vector<1x32x3xf32>
    %48 = vector.shape_cast %47 : vector<1x32x3xf32> to vector<32x3xf32>
    %cst_25 = arith.constant dense<0.000000e+00> : vector<32x256xf32>
    %49 = tpu.matmul %48, %46, %cst_25 {dimension_numbers = #tpu.dot_dimension_numbers<[1], [0], [0], [1], [0, 0, 1, 1], [], []>} : vector<32x3xf32>, vector<3x256xf32>, vector<32x256xf32> -> vector<32x256xf32>
    %50 = arith.addf %39, %49 : vector<32x256xf32>
    %c0_26 = arith.constant 0 : index
    %c0_27 = arith.constant 0 : index
    %c16 = arith.constant 16 : index
    %51 = vector.load %arg1[%c0_26, %c0_27, %c16] : memref<1x3x384xf32, #tpu.memory_space<vmem>>, vector<1x3x256xf32>
    %52 = vector.shape_cast %51 : vector<1x3x256xf32> to vector<3x256xf32>
    %c0_i32_28 = arith.constant 0 : i32
    %53 = arith.sitofp %c0_i32_28 : i32 to f32
    %54 = vector.shape_cast %18 : vector<1x256xi1> to vector<1x256xi1>
    %55 = vector.broadcast %54 : vector<1x256xi1> to vector<3x256xi1>
    %56 = vector.broadcast %53 : f32 to vector<3x256xf32>
    %57 = arith.select %55, %52, %56 : vector<3x256xi1>, vector<3x256xf32>
    %c3 = arith.constant 3 : index
    %c0_29 = arith.constant 0 : index
    %c0_30 = arith.constant 0 : index
    %58 = vector.load %arg2[%c3, %c0_29, %c0_30] : memref<9x32x3xf32, #tpu.memory_space<vmem>>, vector<1x32x3xf32>
    %59 = vector.shape_cast %58 : vector<1x32x3xf32> to vector<32x3xf32>
    %cst_31 = arith.constant dense<0.000000e+00> : vector<32x256xf32>
    %60 = tpu.matmul %59, %57, %cst_31 {dimension_numbers = #tpu.dot_dimension_numbers<[1], [0], [0], [1], [0, 0, 1, 1], [], []>} : vector<32x3xf32>, vector<3x256xf32>, vector<32x256xf32> -> vector<32x256xf32>
    %61 = arith.addf %50, %60 : vector<32x256xf32>
    %c0_32 = arith.constant 0 : index
    %c0_33 = arith.constant 0 : index
    %c17 = arith.constant 17 : index
    %62 = vector.load %arg1[%c0_32, %c0_33, %c17] : memref<1x3x384xf32, #tpu.memory_space<vmem>>, vector<1x3x256xf32>
    %63 = vector.shape_cast %62 : vector<1x3x256xf32> to vector<3x256xf32>
    %c4 = arith.constant 4 : index
    %c0_34 = arith.constant 0 : index
    %c0_35 = arith.constant 0 : index
    %64 = vector.load %arg2[%c4, %c0_34, %c0_35] : memref<9x32x3xf32, #tpu.memory_space<vmem>>, vector<1x32x3xf32>
    %65 = vector.shape_cast %64 : vector<1x32x3xf32> to vector<32x3xf32>
    %cst_36 = arith.constant dense<0.000000e+00> : vector<32x256xf32>
    %66 = tpu.matmul %65, %63, %cst_36 {dimension_numbers = #tpu.dot_dimension_numbers<[1], [0], [0], [1], [0, 0, 1, 1], [], []>} : vector<32x3xf32>, vector<3x256xf32>, vector<32x256xf32> -> vector<32x256xf32>
    %67 = arith.addf %61, %66 : vector<32x256xf32>
    %c0_37 = arith.constant 0 : index
    %c0_38 = arith.constant 0 : index
    %c18 = arith.constant 18 : index
    %68 = vector.load %arg1[%c0_37, %c0_38, %c18] : memref<1x3x384xf32, #tpu.memory_space<vmem>>, vector<1x3x256xf32>
    %69 = vector.shape_cast %68 : vector<1x3x256xf32> to vector<3x256xf32>
    %c0_i32_39 = arith.constant 0 : i32
    %70 = arith.sitofp %c0_i32_39 : i32 to f32
    %71 = vector.shape_cast %20 : vector<1x256xi1> to vector<1x256xi1>
    %72 = vector.broadcast %71 : vector<1x256xi1> to vector<3x256xi1>
    %73 = vector.broadcast %70 : f32 to vector<3x256xf32>
    %74 = arith.select %72, %69, %73 : vector<3x256xi1>, vector<3x256xf32>
    %c5 = arith.constant 5 : index
    %c0_40 = arith.constant 0 : index
    %c0_41 = arith.constant 0 : index
    %75 = vector.load %arg2[%c5, %c0_40, %c0_41] : memref<9x32x3xf32, #tpu.memory_space<vmem>>, vector<1x32x3xf32>
    %76 = vector.shape_cast %75 : vector<1x32x3xf32> to vector<32x3xf32>
    %cst_42 = arith.constant dense<0.000000e+00> : vector<32x256xf32>
    %77 = tpu.matmul %76, %74, %cst_42 {dimension_numbers = #tpu.dot_dimension_numbers<[1], [0], [0], [1], [0, 0, 1, 1], [], []>} : vector<32x3xf32>, vector<3x256xf32>, vector<32x256xf32> -> vector<32x256xf32>
    %78 = arith.addf %67, %77 : vector<32x256xf32>
    %c0_43 = arith.constant 0 : index
    %c0_44 = arith.constant 0 : index
    %c32 = arith.constant 32 : index
    %79 = vector.load %arg1[%c0_43, %c0_44, %c32] : memref<1x3x384xf32, #tpu.memory_space<vmem>>, vector<1x3x256xf32>
    %80 = vector.shape_cast %79 : vector<1x3x256xf32> to vector<3x256xf32>
    %c0_i32_45 = arith.constant 0 : i32
    %81 = arith.sitofp %c0_i32_45 : i32 to f32
    %82 = vector.shape_cast %18 : vector<1x256xi1> to vector<1x256xi1>
    %83 = vector.broadcast %82 : vector<1x256xi1> to vector<3x256xi1>
    %84 = vector.broadcast %81 : f32 to vector<3x256xf32>
    %85 = arith.select %83, %80, %84 : vector<3x256xi1>, vector<3x256xf32>
    %c6 = arith.constant 6 : index
    %c0_46 = arith.constant 0 : index
    %c0_47 = arith.constant 0 : index
    %86 = vector.load %arg2[%c6, %c0_46, %c0_47] : memref<9x32x3xf32, #tpu.memory_space<vmem>>, vector<1x32x3xf32>
    %87 = vector.shape_cast %86 : vector<1x32x3xf32> to vector<32x3xf32>
    %cst_48 = arith.constant dense<0.000000e+00> : vector<32x256xf32>
    %88 = tpu.matmul %87, %85, %cst_48 {dimension_numbers = #tpu.dot_dimension_numbers<[1], [0], [0], [1], [0, 0, 1, 1], [], []>} : vector<32x3xf32>, vector<3x256xf32>, vector<32x256xf32> -> vector<32x256xf32>
    %89 = arith.addf %78, %88 : vector<32x256xf32>
    %c0_49 = arith.constant 0 : index
    %c0_50 = arith.constant 0 : index
    %c33 = arith.constant 33 : index
    %90 = vector.load %arg1[%c0_49, %c0_50, %c33] : memref<1x3x384xf32, #tpu.memory_space<vmem>>, vector<1x3x256xf32>
    %91 = vector.shape_cast %90 : vector<1x3x256xf32> to vector<3x256xf32>
    %c7 = arith.constant 7 : index
    %c0_51 = arith.constant 0 : index
    %c0_52 = arith.constant 0 : index
    %92 = vector.load %arg2[%c7, %c0_51, %c0_52] : memref<9x32x3xf32, #tpu.memory_space<vmem>>, vector<1x32x3xf32>
    %93 = vector.shape_cast %92 : vector<1x32x3xf32> to vector<32x3xf32>
    %cst_53 = arith.constant dense<0.000000e+00> : vector<32x256xf32>
    %94 = tpu.matmul %93, %91, %cst_53 {dimension_numbers = #tpu.dot_dimension_numbers<[1], [0], [0], [1], [0, 0, 1, 1], [], []>} : vector<32x3xf32>, vector<3x256xf32>, vector<32x256xf32> -> vector<32x256xf32>
    %95 = arith.addf %89, %94 : vector<32x256xf32>
    %c0_54 = arith.constant 0 : index
    %c0_55 = arith.constant 0 : index
    %c34 = arith.constant 34 : index
    %96 = vector.load %arg1[%c0_54, %c0_55, %c34] : memref<1x3x384xf32, #tpu.memory_space<vmem>>, vector<1x3x256xf32>
    %97 = vector.shape_cast %96 : vector<1x3x256xf32> to vector<3x256xf32>
    %c0_i32_56 = arith.constant 0 : i32
    %98 = arith.sitofp %c0_i32_56 : i32 to f32
    %99 = vector.shape_cast %20 : vector<1x256xi1> to vector<1x256xi1>
    %100 = vector.broadcast %99 : vector<1x256xi1> to vector<3x256xi1>
    %101 = vector.broadcast %98 : f32 to vector<3x256xf32>
    %102 = arith.select %100, %97, %101 : vector<3x256xi1>, vector<3x256xf32>
    %c8 = arith.constant 8 : index
    %c0_57 = arith.constant 0 : index
    %c0_58 = arith.constant 0 : index
    %103 = vector.load %arg2[%c8, %c0_57, %c0_58] : memref<9x32x3xf32, #tpu.memory_space<vmem>>, vector<1x32x3xf32>
    %104 = vector.shape_cast %103 : vector<1x32x3xf32> to vector<32x3xf32>
    %cst_59 = arith.constant dense<0.000000e+00> : vector<32x256xf32>
    %105 = tpu.matmul %104, %102, %cst_59 {dimension_numbers = #tpu.dot_dimension_numbers<[1], [0], [0], [1], [0, 0, 1, 1], [], []>} : vector<32x3xf32>, vector<3x256xf32>, vector<32x256xf32> -> vector<32x256xf32>
    %106 = arith.addf %95, %105 : vector<32x256xf32>
    %107 = vector.broadcast %21 : vector<32x1xf32> to vector<32x256xf32>
    %108 = arith.addf %106, %107 : vector<32x256xf32>
    %cst_60 = arith.constant 0.000000e+00 : f32
    %109 = vector.broadcast %cst_60 : f32 to vector<32x256xf32>
    %110 = arith.maximumf %108, %109 : vector<32x256xf32>
    %c0_61 = arith.constant 0 : index
    %c0_62 = arith.constant 0 : index
    %c0_63 = arith.constant 0 : index
    %111 = vector.load %arg4[%c0_61, %c0_62, %c0_63] : memref<1x32x256xf32, #tpu.memory_space<vmem>>, vector<1x32x256xf32>
    %112 = vector.shape_cast %111 : vector<1x32x256xf32> to vector<32x256xf32>
    %113 = vector.shape_cast %110 : vector<32x256xf32> to vector<1x32x256xf32>
    tpu.vector_store %arg4[%c0_61, %c0_62, %c0_63], %113 {strides = array<i32>} : memref<1x32x256xf32, #tpu.memory_space<vmem>>, vector<1x32x256xf32>,
    return
  }
  func.func @transform_0(%arg0: i32) -> (i32, i32, i32) {
    %c0_i32 = arith.constant 0 : i32
    %c0_i32_0 = arith.constant 0 : i32
    %c0_i32_1 = arith.constant 0 : i32
    return %arg0, %c0_i32, %c0_i32_0 : i32, i32, i32
  }
  func.func @transform_1(%arg0: i32) -> (i32, i32, i32) {
    %c0_i32 = arith.constant 0 : i32
    %c0_i32_0 = arith.constant 0 : i32
    %c0_i32_1 = arith.constant 0 : i32
    %c0_i32_2 = arith.constant 0 : i32
    return %c0_i32, %c0_i32_0, %c0_i32_1 : i32, i32, i32
  }
  func.func @transform_2(%arg0: i32) -> (i32, i32) {
    %c0_i32 = arith.constant 0 : i32
    %c0_i32_0 = arith.constant 0 : i32
    %c0_i32_1 = arith.constant 0 : i32
    return %c0_i32, %c0_i32_0 : i32, i32
  }
  func.func @transform_3(%arg0: i32) -> (i32, i32, i32) {
    %c0_i32 = arith.constant 0 : i32
    %c0_i32_0 = arith.constant 0 : i32
    %c0_i32_1 = arith.constant 0 : i32
    return %arg0, %c0_i32, %c0_i32_0 : i32, i32, i32
  }
}

</mosaic_0001>

<llo_original>
// kernel: cnn_embed_forward.1
$region0: #{cnn_embed_forward.1}
  #allocation0 [shape = 'u32[]', space=smem, size = 0x4, offset = 0x4, fixed_abs, tag = 'smem constant byte address 0x4 - core index']
  #allocation1 [shape = 'u32[144,128]{1,0:T(1,128)}', space=vmem, size = 0x12000, scoped, tag = 'internal scratch']
  %s0 = inlined_call_operand.vmem [shape: f32[2,3,384], index: 0, kind: input, shape index: {}]
  %s1 = inlined_call_operand.vmem [shape: f32[9,32,3], index: 1, kind: input, shape index: {}]
  %s2 = inlined_call_operand.vmem [shape: f32[32,1], index: 2, kind: input, shape index: {}]
  %s3 = inlined_call_operand.vmem [shape: f32[2,32,256], index: 3, kind: output, shape index: {}]
  %s4 = sld [smem:[#allocation0]]
  $region45: #{cnn_embed_forward.1} parent=0
    _
  %s6 = ssub.s32 1, %s4
  %s7 = scalar_select 0, %s6, %s4
  loop: start=0, step=1, limit=4
  $region2: #{cnn_embed_forward.1} parent=0 // loop_pre_header
    _
  $region3: #{cnn_embed_forward.1} parent=0 // loop_header
    %s9 = sphi 0, %s13
    %p10 = scmp.ge.s32.totalorder %s9, 4
    %s19 = sphi 0, %s21
    %s22 = sphi 0, %s19
    %s23 = sphi 0, %s22
    %s39 = sphi 0, %s23
    %s43 = sphi 0, %s43
    %s45 = sphi 0, %s43
    %s46 = sphi 0, %s45
    %s60 = sphi 0, %s46
    %s64 = sphi 0, %s64
    %s66 = sphi 0, %s64
    %s67 = sphi 0, %s66
    %s81 = sphi 0, %s67
    %s87 = sphi 0, %s89
    %s90 = sphi 0, %s87
    %s91 = sphi 0, %s90
    %s107 = sphi 0, %s91
  $region4: #{cnn_embed_forward.1} parent=0 // loop_header_branch
    %12 = sbr.rel (%p10) target = $region8
  $region5: #{cnn_embed_forward.1} parent=0 // loop_body
    %s14 = ssub.s32 %s9, 1
    %s15 = ssub.s32 %s9, 2
    %s16 = sadd.s32 %s9, 1
    %s17 = ssub.s32 %s9, %s16
    %p18 = scmp.eq.s32.totalorder %s17, 0
    %s20 = sadd.s32 %s19, 1
    %s21 = scalar_select %p18, %s19, %s20
    %p24 = pneg %p18
    %p25 = scmp.eq.s32.totalorder %s9, 1
    %p26 = por %p24, %p25
    %p27 = scmp.ne.s32.totalorder %s19, %s22
    %p28 = scmp.eq.s32.totalorder %s9, 0
    %p29 = por %p27, %p28
    %p30 = scmp.ne.s32.totalorder %s19, %s22
    %p31 = scmp.eq.s32.totalorder %s14, 1
    %p32 = por %p30, %p31
    %p33 = scmp.ne.s32.totalorder %s22, %s23
    %p34 = scmp.eq.s32.totalorder %s14, 0
    %p35 = por %p33, %p34
    %p36 = scmp.ne.s32.totalorder %s22, %s23
    %p37 = scmp.eq.s32.totalorder %s15, 1
    %p38 = por %p36, %p37
    %p40 = scmp.ne.s32.totalorder %s23, %s39
    %p41 = scmp.eq.s32.totalorder %s15, 0
    %p42 = por %p40, %p41
    %s44 = sadd.s32 %s43, 1
    %p47 = scmp.eq.s32.totalorder %s9, 1
    %p48 = scmp.ne.s32.totalorder %s43, %s45
    %p49 = scmp.eq.s32.totalorder %s9, 0
    %p50 = por %p48, %p49
    %p51 = scmp.ne.s32.totalorder %s43, %s45
    %p52 = scmp.eq.s32.totalorder %s14, 1
    %p53 = por %p51, %p52
    %p54 = scmp.ne.s32.totalorder %s45, %s46
    %p55 = scmp.eq.s32.totalorder %s14, 0
    %p56 = por %p54, %p55
    %p57 = scmp.ne.s32.totalorder %s45, %s46
    %p58 = scmp.eq.s32.totalorder %s15, 1
    %p59 = por %p57, %p58
    %p61 = scmp.ne.s32.totalorder %s46, %s60
    %p62 = scmp.eq.s32.totalorder %s15, 0
    %p63 = por %p61, %p62
    %s65 = sadd.s32 %s64, 1
    %p68 = scmp.eq.s32.totalorder %s9, 1
    %p69 = scmp.ne.s32.totalorder %s64, %s66
    %p70 = scmp.eq.s32.totalorder %s9, 0
    %p71 = por %p69, %p70
    %p72 = scmp.ne.s32.totalorder %s64, %s66
    %p73 = scmp.eq.s32.totalorder %s14, 1
    %p74 = por %p72, %p73
    %p75 = scmp.ne.s32.totalorder %s66, %s67
    %p76 = scmp.eq.s32.totalorder %s14, 0
    %p77 = por %p75, %p76
    %p78 = scmp.ne.s32.totalorder %s66, %s67
    %p79 = scmp.eq.s32.totalorder %s15, 1
    %p80 = por %p78, %p79
    %p82 = scmp.ne.s32.totalorder %s67, %s81
    %p83 = scmp.eq.s32.totalorder %s15, 0
    %p84 = por %p82, %p83
    %s85 = ssub.s32 %s9, %s16
    %p86 = scmp.eq.s32.totalorder %s85, 0
    %s88 = sadd.s32 %s87, 1
    %s89 = scalar_select %p86, %s87, %s88
    %p92 = pneg %p86
    %p93 = scmp.eq.s32.totalorder %s9, 1
    %p94 = por %p92, %p93
    %p95 = scmp.ne.s32.totalorder %s87, %s90
    %p96 = scmp.eq.s32.totalorder %s9, 0
    %p97 = por %p95, %p96
    %p98 = scmp.ne.s32.totalorder %s87, %s90
    %p99 = scmp.eq.s32.totalorder %s14, 1
    %p100 = por %p98, %p99
    %p101 = scmp.ne.s32.totalorder %s90, %s91
    %p102 = scmp.eq.s32.totalorder %s14, 0
    %p103 = por %p101, %p102
    %p104 = scmp.ne.s32.totalorder %s90, %s91
    %p105 = scmp.eq.s32.totalorder %s15, 1
    %p106 = por %p104, %p105
    %p108 = scmp.ne.s32.totalorder %s91, %s107
    %p109 = scmp.eq.s32.totalorder %s15, 0
    %p110 = por %p108, %p109
    %p111 = scmp.le.s32.totalorder 1, %s9
    %p112 = scmp.lt.s32.totalorder %s9, 3
    %p113 = pnand %p111, %p112
    %p114 = pneg %p113
    // Predicated region
    $region9: #{cnn_embed_forward.1} parent=5 // pred_check
      _
    $region10: #{cnn_embed_forward.1} parent=5 // pred_check_branch
      %116 = sbr.rel (%p113) target = $region12
    $region11: #{cnn_embed_forward.1} parent=5 // pred_region
      %s117 = ssub.s32 %s9, 1
      // Predicated region
      $region13: #{cnn_embed_forward.1} parent=11 // pred_check
        %p118 = pneg %p56
      $region14: #{cnn_embed_forward.1} parent=11 // pred_check_branch
        %120 = sbr.rel (%p118) target = $region16
      $region15: #{cnn_embed_forward.1} parent=11 // pred_region
        _
      $region16: #{cnn_embed_forward.1} parent=11 // pred_fallthru
        _
      // Predicated region
      $region17: #{cnn_embed_forward.1} parent=11 // pred_check
        %p121 = pneg %p77
      $region18: #{cnn_embed_forward.1} parent=11 // pred_check_branch
        %123 = sbr.rel (%p121) target = $region20
      $region19: #{cnn_embed_forward.1} parent=11 // pred_region
        _
      $region20: #{cnn_embed_forward.1} parent=11 // pred_fallthru
        _
    $region12: #{cnn_embed_forward.1} parent=5 // pred_fallthru
      _
    %p124 = scmp.lt.s32.totalorder %s9, 2
    // Predicated region
    $region21: #{cnn_embed_forward.1} parent=5 // pred_check
      %p125 = pneg %p124
    $region22: #{cnn_embed_forward.1} parent=5 // pred_check_branch
      %127 = sbr.rel (%p125) target = $region24
    $region23: #{cnn_embed_forward.1} parent=5 // pred_region
      // Predicated region
      $region25: #{cnn_embed_forward.1} parent=23 // pred_check
        %p128 = pneg %p29
      $region26: #{cnn_embed_forward.1} parent=23 // pred_check_branch
        %130 = sbr.rel (%p128) target = $region28
      $region27: #{cnn_embed_forward.1} parent=23 // pred_region
        %p131 = scmp.lt.s32.totalorder %s9, 1
        %s132 = scalar_select %p131, %s9, 1
        %s133 = smul.addr %s132, 3
        %s134 = smul.addr %s133, 4
        %s135 = scalar_lea.vmem %s0, %s134
      $region28: #{cnn_embed_forward.1} parent=23 // pred_fallthru
        _
    $region24: #{cnn_embed_forward.1} parent=5 // pred_fallthru
      _
    %p136 = scmp.le.s32.totalorder 1, %s9
    %p137 = scmp.lt.s32.totalorder %s9, 3
    %p138 = pnand %p136, %p137
    %p139 = pneg %p138
    // Predicated region
    $region29: #{cnn_embed_forward.1} parent=5 // pred_check
      _
    $region30: #{cnn_embed_forward.1} parent=5 // pred_check_branch
      %141 = sbr.rel (%p138) target = $region32
    $region31: #{cnn_embed_forward.1} parent=5 // pred_region
      %s142 = ssub.s32 %s9, 1
      %p143 = scmp.lt.s32.totalorder %s14, 1
      %s144 = scalar_select %p143, %s14, 1
      %s145 = smul.addr %s144, 3
      %s146 = smul.addr %s145, 4
      %s147 = scalar_lea.vmem %s0, %s146
      %p148 = pneg %p35
      %p149 = pneg %p32
      %p150 = pneg %p56
      %p151 = pneg %p53
      %p152 = pneg %p77
      %p153 = pneg %p74
      %p154 = pneg %p103
      %p155 = pneg %p100
      %p156 = scmp.lt.s32.totalorder %s14, 1
      %s157 = scalar_select %p156, %s14, 1
      %s158 = smul.addr %s157, 8
      %s159 = smul.addr %s158, 8
      %s160 = scalar_lea.vmem %s3, %s159
      %p161 = scmp.lt.s32.totalorder %s14, 1
      %s162 = scalar_select %p161, %s14, 1
      %s163 = smul.addr %s162, 3
      %s164 = smul.addr %s163, 4
      %s165 = scalar_lea.vmem %s0, %s164
      %p166 = scmp.lt.s32.totalorder %s14, 1
      %s167 = scalar_select %p166, %s14, 1
      %s168 = smul.addr %s167, 8
      %s169 = smul.addr %s168, 8
      %s170 = scalar_lea.vmem %s3, %s169
      %v171 = vlaneseq
      %v172 = vand.u32 %v171, 127
      %v173 = vadd.s32 %v172, 128
      %vm174 = vcmp.lt.s32.totalorder %v172, 0
      %v175 = vsub.s32 0, %v172
      %v176 = vsel %vm174, %v175, %v172
      %v177 = vshrl.u32 %v176, 4
      %v178 = vand.u32 %v176, 15
      %v179 = vsub.s32 0, %v178
      %v180 = vsel %vm174, %v179, %v178
      %vm181 = vcmp.lt.s32.totalorder %v173, 0
      %v182 = vsub.s32 0, %v173
      %v183 = vsel %vm181, %v182, %v173
      %v184 = vshrl.u32 %v183, 4
      %v185 = vand.u32 %v183, 15
      %v186 = vsub.s32 0, %v185
      %v187 = vsel %vm181, %v186, %v185
      %vm188 = vcmp.ne.s32.totalorder %v180, 0
      %vm189 = vcmp.ne.s32.totalorder %v187, 0
      %vm190 = vcmp.lt.s32.totalorder %v180, 0
      %vm191 = vcmp.lt.s32.totalorder %v187, 0
      %vm192 = vmand %vm190, %vm188
      %vm193 = vmand %vm191, %vm189
      %v194 = vadd.s32 %v180, 16
      %v195 = vadd.s32 %v187, 16
      %v196 = vsel %vm192, %v194, %v180
      %v197 = vsel %vm193, %v195, %v187
      %vm198 = vcmp.ne.s32.totalorder %v196, 0
      %vm199 = vcmp.ne.s32.totalorder %v197, 0
      %vm200 = vcmp.ne.s32.totalorder %v196, 15
      %vm201 = vcmp.ne.s32.totalorder %v197, 15
      %v202 = vld [vmem:[%s2] sm:$0xff]
      %v203 = vld [vmem:[%s2 + $0x8] sm:$0xff]
      %v204 = vld [vmem:[%s2 + $0x10] sm:$0xff]
      %v205 = vld [vmem:[%s2 + $0x18] sm:$0xff]
      %v206 = vld [vmem:[%s165] sm:$0x77]
      %v207 = vsel %vm198, 1, 0
      %v208 = vsel %vm199, 1, 0
      %vm209 = vcmp.eq.s32.totalorder %v207, 1
      %vm210 = vcmp.eq.s32.totalorder %v208, 1
      %v212 = vcombine.high %v206, %v206
      %v214 = vsel %vm209, %v206, 0.0
      %v215 = vsel %vm210, %v212, 0.0
      %v216 = vld [vmem:[%s1] sm:$0xff]
      %v217 = vld [vmem:[%s1 + $0x8] sm:$0xff]
      %v218 = vld [vmem:[%s1 + $0x10] sm:$0xff]
      %v219 = vld [vmem:[%s1 + $0x18] sm:$0xff]
      %v220 = vld [vmem:[%s165 + $0x8] sm:$0x7]
      %s221 = scalar_lea.vmem %s1, 32
      %v222 = vld [vmem:[%s221] sm:$0xff]
      %v223 = vld [vmem:[%s221 + $0x8] sm:$0xff]
      %v224 = vld [vmem:[%s221 + $0x10] sm:$0xff]
      %v225 = vld [vmem:[%s221 + $0x18] sm:$0xff]
      %227 = vrot.lane.b32.xlu0 %v206, 127
      %v228 = vpop.permute.xlu0 %227
      %229 = vrot.lane.b32.xlu0 %v212, 127
      %v230 = vpop.permute.xlu0 %229
      %231 = vrot.lane.b32.xlu0 %v220, 127
      %v232 = vpop.permute.xlu0 %231
      %vm233 = vcmask 1039360
      %v234 = vsel %vm233, %v228, %v230
      %v235 = vsel %vm233, %v230, %v232
      %vm236 = vcmask 23552
      %v238 = vsel %vm236, %v222, 0
      %v241 = vsel %vm236, %v223, 0
      %v244 = vsel %vm236, %v224, 0
      %v247 = vsel %vm236, %v225, 0
      %vm249 = vcmask 1042432
      %v250 = vsel %vm249, %v234, 0
      %v252 = vsel %vm249, %v235, 0
      %254 = vmatprep.subr.mxu0 0.0
      %255 = vmatpush1.msra.mxu0 0.0
      %256 = vmatprep.subr.mxu0 0.0
      %257 = vmatpush1.msra.mxu0 0.0
      %258 = vmatprep.subr.mxu0 0.0
      %259 = vmatpush1.msra.mxu0 0.0
      %260 = vmatprep.subr.mxu0 0.0
      %261 = vmatpush1.msra.mxu0 0.0
      %262 = vmatprep.subr.mxu0 0.0
      %263 = vmatpush1.msra.mxu0 0.0
      %264 = vmatprep.subr.mxu0 0.0
      %265 = vmatpush1.msra.mxu0 0.0
      %266 = vmatprep.subr.mxu0 0.0
      %267 = vmatpush1.msra.mxu0 0.0
      %268 = vmatprep.subr.mxu0 0.0
      %269 = vmatpush1.msra.mxu0 0.0
      %270 = vmatprep.subr.mxu0 0.0
      %271 = vmatpush1.msra.mxu0 0.0
      %272 = vmatprep.subr.mxu0 0.0
      %273 = vmatpush1.msra.mxu0 0.0
      %274 = vmatprep.subr.mxu0 0.0
      %275 = vmatpush1.msra.mxu0 0.0
      %276 = vmatprep.subr.mxu0 0.0
      %277 = vmatpush1.msra.mxu0 0.0
      %278 = vmatprep.subr.mxu0 0.0
      %279 = vmatpush1.msra.mxu0 0.0
      %280 = vmatprep.subr.mxu0 0.0
      %281 = vmatpush1.msra.mxu0 0.0
      %282 = vmatprep.subr.mxu0 0.0
      %283 = vmatpush1.msra.mxu0 0.0
      %284 = vmatprep.subr.mxu0 %v252
      %285 = vmatpush1.msra.mxu0 %v250
      %286 = vmatprep.subr.mxu0 0.0
      %287 = vmatpush2.msra.mxu0 0.0
      %288 = vmatprep.subr.mxu0 0.0
      %289 = vmatpush2.msra.mxu0 0.0
      %290 = vmatprep.subr.mxu0 0.0
      %291 = vmatpush2.msra.mxu0 0.0
      %292 = vmatprep.subr.mxu0 0.0
      %293 = vmatpush2.msra.mxu0 0.0
      %294 = vmatprep.subr.mxu0 0.0
      %295 = vmatpush2.msra.mxu0 0.0
      %296 = vmatprep.subr.mxu0 0.0
      %297 = vmatpush2.msra.mxu0 0.0
      %298 = vmatprep.subr.mxu0 0.0
      %299 = vmatpush2.msra.mxu0 0.0
      %300 = vmatprep.subr.mxu0 0.0
      %301 = vmatpush2.msra.mxu0 0.0
      %302 = vmatprep.subr.mxu0 0.0
      %303 = vmatpush2.msra.mxu0 0.0
      %304 = vmatprep.subr.mxu0 0.0
      %305 = vmatpush2.msra.mxu0 0.0
      %306 = vmatprep.subr.mxu0 0.0
      %307 = vmatpush2.msra.mxu0 0.0
      %308 = vmatprep.subr.mxu0 0.0
      %309 = vmatpush2.msra.mxu0 0.0
      %310 = vmatprep.subr.mxu0 0.0
      %311 = vmatpush2.msra.mxu0 0.0
      %312 = vmatprep.subr.mxu0 0.0
      %313 = vmatpush2.msra.mxu0 0.0
      %314 = vmatprep.subr.mxu0 0.0
      %315 = vmatpush2.msra.mxu0 0.0
      %316 = vmatprep.subr.mxu0 0.0
      %317 = vmatpush2.msra.mxu0 0.0
      %318 = vmatprep.mubr.f32.mxu0 0.0
      %319 = vmatmul.mubr.f32.gmra.mxu0 %v238
      %v320 = vpop.f32.mrf.mxu0
      %v321 = vadd.f32 0.0, %v320
      %v322 = vpop.f32.mrf.mxu0
      %v323 = vadd.f32 0.0, %v322
      %324 = vmatprep.mubr.f32.mxu0 0.0
      %325 = vmatmul.mubr.f32.gmra.mxu0 %v241
      %v326 = vpop.f32.mrf.mxu0
      %v327 = vadd.f32 0.0, %v326
      %v328 = vpop.f32.mrf.mxu0
      %v329 = vadd.f32 0.0, %v328
      %330 = vmatprep.mubr.f32.mxu0 0.0
      %331 = vmatmul.mubr.f32.gmra.mxu0 %v244
      %v332 = vpop.f32.mrf.mxu0
      %v333 = vadd.f32 0.0, %v332
      %v334 = vpop.f32.mrf.mxu0
      %v335 = vadd.f32 0.0, %v334
      %336 = vmatprep.mubr.f32.mxu0 0.0
      %337 = vmatmul.mubr.f32.gmra.mxu0 %v247
      %v338 = vpop.f32.mrf.mxu0
      %v339 = vadd.f32 0.0, %v338
      %v340 = vpop.f32.mrf.mxu0
      %v341 = vadd.f32 0.0, %v340
      %342 = vdwg.mxu0
      %v344 = vsel %vm236, %v216, 0
      %v347 = vsel %vm236, %v217, 0
      %v350 = vsel %vm236, %v218, 0
      %v353 = vsel %vm236, %v219, 0
      %v356 = vsel %vm249, %v214, 0
      %v359 = vsel %vm249, %v215, 0
      %361 = vmatprep.subr.mxu0 0.0
      %362 = vmatpush1.msra.mxu0 0.0
      %363 = vmatprep.subr.mxu0 0.0
      %364 = vmatpush1.msra.mxu0 0.0
      %365 = vmatprep.subr.mxu0 0.0
      %366 = vmatpush1.msra.mxu0 0.0
      %367 = vmatprep.subr.mxu0 0.0
      %368 = vmatpush1.msra.mxu0 0.0
      %369 = vmatprep.subr.mxu0 0.0
      %370 = vmatpush1.msra.mxu0 0.0
      %371 = vmatprep.subr.mxu0 0.0
      %372 = vmatpush1.msra.mxu0 0.0
      %373 = vmatprep.subr.mxu0 0.0
      %374 = vmatpush1.msra.mxu0 0.0
      %375 = vmatprep.subr.mxu0 0.0
      %376 = vmatpush1.msra.mxu0 0.0
      %377 = vmatprep.subr.mxu0 0.0
      %378 = vmatpush1.msra.mxu0 0.0
      %379 = vmatprep.subr.mxu0 0.0
      %380 = vmatpush1.msra.mxu0 0.0
      %381 = vmatprep.subr.mxu0 0.0
      %382 = vmatpush1.msra.mxu0 0.0
      %383 = vmatprep.subr.mxu0 0.0
      %384 = vmatpush1.msra.mxu0 0.0
      %385 = vmatprep.subr.mxu0 0.0
      %386 = vmatpush1.msra.mxu0 0.0
      %387 = vmatprep.subr.mxu0 0.0
      %388 = vmatpush1.msra.mxu0 0.0
      %389 = vmatprep.subr.mxu0 0.0
      %390 = vmatpush1.msra.mxu0 0.0
      %391 = vmatprep.subr.mxu0 %v359
      %392 = vmatpush1.msra.mxu0 %v356
      %393 = vmatprep.subr.mxu0 0.0
      %394 = vmatpush2.msra.mxu0 0.0
      %395 = vmatprep.subr.mxu0 0.0
      %396 = vmatpush2.msra.mxu0 0.0
      %397 = vmatprep.subr.mxu0 0.0
      %398 = vmatpush2.msra.mxu0 0.0
      %399 = vmatprep.subr.mxu0 0.0
      %400 = vmatpush2.msra.mxu0 0.0
      %401 = vmatprep.subr.mxu0 0.0
      %402 = vmatpush2.msra.mxu0 0.0
      %403 = vmatprep.subr.mxu0 0.0
      %404 = vmatpush2.msra.mxu0 0.0
      %405 = vmatprep.subr.mxu0 0.0
      %406 = vmatpush2.msra.mxu0 0.0
      %407 = vmatprep.subr.mxu0 0.0
      %408 = vmatpush2.msra.mxu0 0.0
      %409 = vmatprep.subr.mxu0 0.0
      %410 = vmatpush2.msra.mxu0 0.0
      %411 = vmatprep.subr.mxu0 0.0
      %412 = vmatpush2.msra.mxu0 0.0
      %413 = vmatprep.subr.mxu0 0.0
      %414 = vmatpush2.msra.mxu0 0.0
      %415 = vmatprep.subr.mxu0 0.0
      %416 = vmatpush2.msra.mxu0 0.0
      %417 = vmatprep.subr.mxu0 0.0
      %418 = vmatpush2.msra.mxu0 0.0
      %419 = vmatprep.subr.mxu0 0.0
      %420 = vmatpush2.msra.mxu0 0.0
      %421 = vmatprep.subr.mxu0 0.0
      %422 = vmatpush2.msra.mxu0 0.0
      %423 = vmatprep.subr.mxu0 0.0
      %424 = vmatpush2.msra.mxu0 0.0
      %425 = vmatprep.mubr.f32.mxu0 0.0
      %426 = vmatmul.mubr.f32.gmra.mxu0 %v344
      %v427 = vpop.f32.mrf.mxu0
      %v428 = vadd.f32 %v321, %v427
      %v429 = vpop.f32.mrf.mxu0
      %v430 = vadd.f32 %v323, %v429
      %431 = vmatprep.mubr.f32.mxu0 0.0
      %432 = vmatmul.mubr.f32.gmra.mxu0 %v347
      %v433 = vpop.f32.mrf.mxu0
      %v434 = vadd.f32 %v327, %v433
      %v435 = vpop.f32.mrf.mxu0
      %v436 = vadd.f32 %v329, %v435
      %437 = vmatprep.mubr.f32.mxu0 0.0
      %438 = vmatmul.mubr.f32.gmra.mxu0 %v350
      %v439 = vpop.f32.mrf.mxu0
      %v440 = vadd.f32 %v333, %v439
      %v441 = vpop.f32.mrf.mxu0
      %v442 = vadd.f32 %v335, %v441
      %443 = vmatprep.mubr.f32.mxu0 0.0
      %444 = vmatmul.mubr.f32.gmra.mxu0 %v353
      %v445 = vpop.f32.mrf.mxu0
      %v446 = vadd.f32 %v339, %v445
      %v447 = vpop.f32.mrf.mxu0
      %v448 = vadd.f32 %v341, %v447
      %449 = vdwg.mxu0
      %v450 = vld [vmem:[%s165] sm:$0x77]
      %v451 = vld [vmem:[%s165 + $0x8] sm:$0x7]
      %v452 = vsel %vm200, 1, 0
      %v453 = vsel %vm201, 1, 0
      %vm454 = vcmp.eq.s32.totalorder %v452, 1
      %vm455 = vcmp.eq.s32.totalorder %v453, 1
      %v458 = vcombine.high %v450, %v450
      %459 = vrot.lane.b32.xlu0 %v450, 126
      %v460 = vpop.permute.xlu0 %459
      %461 = vrot.lane.b32.xlu0 %v458, 126
      %v462 = vpop.permute.xlu0 %461
      %463 = vrot.lane.b32.xlu0 %v451, 126
      %v464 = vpop.permute.xlu0 %463
      %vm465 = vcmask 1031168
      %v466 = vsel %vm465, %v460, %v462
      %v467 = vsel %vm465, %v462, %v464
      %v470 = vsel %vm454, %v466, 0.0
      %v471 = vsel %vm455, %v467, 0.0
      %s472 = scalar_lea.vmem %s1, 64
      %v473 = vld [vmem:[%s472] sm:$0xff]
      %v474 = vld [vmem:[%s472 + $0x8] sm:$0xff]
      %v475 = vld [vmem:[%s472 + $0x10] sm:$0xff]
      %v476 = vld [vmem:[%s472 + $0x18] sm:$0xff]
      %v478 = vsel %vm236, %v473, 0
      %v481 = vsel %vm236, %v474, 0
      %v484 = vsel %vm236, %v475, 0
      %v487 = vsel %vm236, %v476, 0
      %v490 = vsel %vm249, %v470, 0
      %v493 = vsel %vm249, %v471, 0
      %495 = vmatprep.subr.mxu0 0.0
      %496 = vmatpush1.msra.mxu0 0.0
      %497 = vmatprep.subr.mxu0 0.0
      %498 = vmatpush1.msra.mxu0 0.0
      %499 = vmatprep.subr.mxu0 0.0
      %500 = vmatpush1.msra.mxu0 0.0
      %501 = vmatprep.subr.mxu0 0.0
      %502 = vmatpush1.msra.mxu0 0.0
      %503 = vmatprep.subr.mxu0 0.0
      %504 = vmatpush1.msra.mxu0 0.0
      %505 = vmatprep.subr.mxu0 0.0
      %506 = vmatpush1.msra.mxu0 0.0
      %507 = vmatprep.subr.mxu0 0.0
      %508 = vmatpush1.msra.mxu0 0.0
      %509 = vmatprep.subr.mxu0 0.0
      %510 = vmatpush1.msra.mxu0 0.0
      %511 = vmatprep.subr.mxu0 0.0
      %512 = vmatpush1.msra.mxu0 0.0
      %513 = vmatprep.subr.mxu0 0.0
      %514 = vmatpush1.msra.mxu0 0.0
      %515 = vmatprep.subr.mxu0 0.0
      %516 = vmatpush1.msra.mxu0 0.0
      %517 = vmatprep.subr.mxu0 0.0
      %518 = vmatpush1.msra.mxu0 0.0
      %519 = vmatprep.subr.mxu0 0.0
      %520 = vmatpush1.msra.mxu0 0.0
      %521 = vmatprep.subr.mxu0 0.0
      %522 = vmatpush1.msra.mxu0 0.0
      %523 = vmatprep.subr.mxu0 0.0
      %524 = vmatpush1.msra.mxu0 0.0
      %525 = vmatprep.subr.mxu0 %v493
      %526 = vmatpush1.msra.mxu0 %v490
      %527 = vmatprep.subr.mxu0 0.0
      %528 = vmatpush2.msra.mxu0 0.0
      %529 = vmatprep.subr.mxu0 0.0
      %530 = vmatpush2.msra.mxu0 0.0
      %531 = vmatprep.subr.mxu0 0.0
      %532 = vmatpush2.msra.mxu0 0.0
      %533 = vmatprep.subr.mxu0 0.0
      %534 = vmatpush2.msra.mxu0 0.0
      %535 = vmatprep.subr.mxu0 0.0
      %536 = vmatpush2.msra.mxu0 0.0
      %537 = vmatprep.subr.mxu0 0.0
      %538 = vmatpush2.msra.mxu0 0.0
      %539 = vmatprep.subr.mxu0 0.0
      %540 = vmatpush2.msra.mxu0 0.0
      %541 = vmatprep.subr.mxu0 0.0
      %542 = vmatpush2.msra.mxu0 0.0
      %543 = vmatprep.subr.mxu0 0.0
      %544 = vmatpush2.msra.mxu0 0.0
      %545 = vmatprep.subr.mxu0 0.0
      %546 = vmatpush2.msra.mxu0 0.0
      %547 = vmatprep.subr.mxu0 0.0
      %548 = vmatpush2.msra.mxu0 0.0
      %549 = vmatprep.subr.mxu0 0.0
      %550 = vmatpush2.msra.mxu0 0.0
      %551 = vmatprep.subr.mxu0 0.0
      %552 = vmatpush2.msra.mxu0 0.0
      %553 = vmatprep.subr.mxu0 0.0
      %554 = vmatpush2.msra.mxu0 0.0
      %555 = vmatprep.subr.mxu0 0.0
      %556 = vmatpush2.msra.mxu0 0.0
      %557 = vmatprep.subr.mxu0 0.0
      %558 = vmatpush2.msra.mxu0 0.0
      %559 = vmatprep.mubr.f32.mxu0 0.0
      %560 = vmatmul.mubr.f32.gmra.mxu0 %v478
      %v561 = vpop.f32.mrf.mxu0
      %v562 = vadd.f32 0.0, %v561
      %v563 = vpop.f32.mrf.mxu0
      %v564 = vadd.f32 0.0, %v563
      %565 = vmatprep.mubr.f32.mxu0 0.0
      %566 = vmatmul.mubr.f32.gmra.mxu0 %v481
      %v567 = vpop.f32.mrf.mxu0
      %v568 = vadd.f32 0.0, %v567
      %v569 = vpop.f32.mrf.mxu0
      %v570 = vadd.f32 0.0, %v569
      %571 = vmatprep.mubr.f32.mxu0 0.0
      %572 = vmatmul.mubr.f32.gmra.mxu0 %v484
      %v573 = vpop.f32.mrf.mxu0
      %v574 = vadd.f32 0.0, %v573
      %v575 = vpop.f32.mrf.mxu0
      %v576 = vadd.f32 0.0, %v575
      %577 = vmatprep.mubr.f32.mxu0 0.0
      %578 = vmatmul.mubr.f32.gmra.mxu0 %v487
      %v579 = vpop.f32.mrf.mxu0
      %v580 = vadd.f32 0.0, %v579
      %v581 = vpop.f32.mrf.mxu0
      %v582 = vadd.f32 0.0, %v581
      %583 = vdwg.mxu0
      %v584 = vadd.f32 %v428, %v562
      %v585 = vadd.f32 %v430, %v564
      %v586 = vadd.f32 %v434, %v568
      %v587 = vadd.f32 %v436, %v570
      %v588 = vadd.f32 %v440, %v574
      %v589 = vadd.f32 %v442, %v576
      %v590 = vadd.f32 %v446, %v580
      %v591 = vadd.f32 %v448, %v582
      %v592 = vld [vmem:[%s165] sm:$0x77]
      %v593 = vld [vmem:[%s165 + $0x8] sm:$0x7]
      %v596 = vcombine.high %v592, %v592
      %597 = vrot.lane.b32.xlu0 %v592, 112
      %v598 = vpop.permute.xlu0 %597
      %599 = vrot.lane.b32.xlu0 %v596, 112
      %v600 = vpop.permute.xlu0 %599
      %601 = vrot.lane.b32.xlu0 %v593, 112
      %v602 = vpop.permute.xlu0 %601
      %vm603 = vcmask 916480
      %v604 = vsel %vm603, %v598, %v600
      %v605 = vsel %vm603, %v600, %v602
      %v608 = vsel %vm209, %v604, 0.0
      %v609 = vsel %vm210, %v605, 0.0
      %s610 = scalar_lea.vmem %s1, 96
      %v611 = vld [vmem:[%s610] sm:$0xff]
      %v612 = vld [vmem:[%s610 + $0x8] sm:$0xff]
      %v613 = vld [vmem:[%s610 + $0x10] sm:$0xff]
      %v614 = vld [vmem:[%s610 + $0x18] sm:$0xff]
      %v616 = vsel %vm236, %v611, 0
      %v619 = vsel %vm236, %v612, 0
      %v622 = vsel %vm236, %v613, 0
      %v625 = vsel %vm236, %v614, 0
      %v628 = vsel %vm249, %v608, 0
      %v631 = vsel %vm249, %v609, 0
      %633 = vmatprep.subr.mxu0 0.0
      %634 = vmatpush1.msra.mxu0 0.0
      %635 = vmatprep.subr.mxu0 0.0
      %636 = vmatpush1.msra.mxu0 0.0
      %637 = vmatprep.subr.mxu0 0.0
      %638 = vmatpush1.msra.mxu0 0.0
      %639 = vmatprep.subr.mxu0 0.0
      %640 = vmatpush1.msra.mxu0 0.0
      %641 = vmatprep.subr.mxu0 0.0
      %642 = vmatpush1.msra.mxu0 0.0
      %643 = vmatprep.subr.mxu0 0.0
      %644 = vmatpush1.msra.mxu0 0.0
      %645 = vmatprep.subr.mxu0 0.0
      %646 = vmatpush1.msra.mxu0 0.0
      %647 = vmatprep.subr.mxu0 0.0
      %648 = vmatpush1.msra.mxu0 0.0
      %649 = vmatprep.subr.mxu0 0.0
      %650 = vmatpush1.msra.mxu0 0.0
      %651 = vmatprep.subr.mxu0 0.0
      %652 = vmatpush1.msra.mxu0 0.0
      %653 = vmatprep.subr.mxu0 0.0
      %654 = vmatpush1.msra.mxu0 0.0
      %655 = vmatprep.subr.mxu0 0.0
      %656 = vmatpush1.msra.mxu0 0.0
      %657 = vmatprep.subr.mxu0 0.0
      %658 = vmatpush1.msra.mxu0 0.0
      %659 = vmatprep.subr.mxu0 0.0
      %660 = vmatpush1.msra.mxu0 0.0
      %661 = vmatprep.subr.mxu0 0.0
      %662 = vmatpush1.msra.mxu0 0.0
      %663 = vmatprep.subr.mxu0 %v631
      %664 = vmatpush1.msra.mxu0 %v628
      %665 = vmatprep.subr.mxu0 0.0
      %666 = vmatpush2.msra.mxu0 0.0
      %667 = vmatprep.subr.mxu0 0.0
      %668 = vmatpush2.msra.mxu0 0.0
      %669 = vmatprep.subr.mxu0 0.0
      %670 = vmatpush2.msra.mxu0 0.0
      %671 = vmatprep.subr.mxu0 0.0
      %672 = vmatpush2.msra.mxu0 0.0
      %673 = vmatprep.subr.mxu0 0.0
      %674 = vmatpush2.msra.mxu0 0.0
      %675 = vmatprep.subr.mxu0 0.0
      %676 = vmatpush2.msra.mxu0 0.0
      %677 = vmatprep.subr.mxu0 0.0
      %678 = vmatpush2.msra.mxu0 0.0
      %679 = vmatprep.subr.mxu0 0.0
      %680 = vmatpush2.msra.mxu0 0.0
      %681 = vmatprep.subr.mxu0 0.0
      %682 = vmatpush2.msra.mxu0 0.0
      %683 = vmatprep.subr.mxu0 0.0
      %684 = vmatpush2.msra.mxu0 0.0
      %685 = vmatprep.subr.mxu0 0.0
      %686 = vmatpush2.msra.mxu0 0.0
      %687 = vmatprep.subr.mxu0 0.0
      %688 = vmatpush2.msra.mxu0 0.0
      %689 = vmatprep.subr.mxu0 0.0
      %690 = vmatpush2.msra.mxu0 0.0
      %691 = vmatprep.subr.mxu0 0.0
      %692 = vmatpush2.msra.mxu0 0.0
      %693 = vmatprep.subr.mxu0 0.0
      %694 = vmatpush2.msra.mxu0 0.0
      %695 = vmatprep.subr.mxu0 0.0
      %696 = vmatpush2.msra.mxu0 0.0
      %697 = vmatprep.mubr.f32.mxu0 0.0
      %698 = vmatmul.mubr.f32.gmra.mxu0 %v616
      %v699 = vpop.f32.mrf.mxu0
      %v700 = vadd.f32 0.0, %v699
      %v701 = vpop.f32.mrf.mxu0
      %v702 = vadd.f32 0.0, %v701
      %703 = vmatprep.mubr.f32.mxu0 0.0
      %704 = vmatmul.mubr.f32.gmra.mxu0 %v619
      %v705 = vpop.f32.mrf.mxu0
      %v706 = vadd.f32 0.0, %v705
      %v707 = vpop.f32.mrf.mxu0
      %v708 = vadd.f32 0.0, %v707
      %709 = vmatprep.mubr.f32.mxu0 0.0
      %710 = vmatmul.mubr.f32.gmra.mxu0 %v622
      %v711 = vpop.f32.mrf.mxu0
      %v712 = vadd.f32 0.0, %v711
      %v713 = vpop.f32.mrf.mxu0
      %v714 = vadd.f32 0.0, %v713
      %715 = vmatprep.mubr.f32.mxu0 0.0
      %716 = vmatmul.mubr.f32.gmra.mxu0 %v625
      %v717 = vpop.f32.mrf.mxu0
      %v718 = vadd.f32 0.0, %v717
      %v719 = vpop.f32.mrf.mxu0
      %v720 = vadd.f32 0.0, %v719
      %721 = vdwg.mxu0
      %v722 = vadd.f32 %v584, %v700
      %v723 = vadd.f32 %v585, %v702
      %v724 = vadd.f32 %v586, %v706
      %v725 = vadd.f32 %v587, %v708
      %v726 = vadd.f32 %v588, %v712
      %v727 = vadd.f32 %v589, %v714
      %v728 = vadd.f32 %v590, %v718
      %v729 = vadd.f32 %v591, %v720
      %v730 = vld [vmem:[%s165] sm:$0x77]
      %v731 = vld [vmem:[%s165 + $0x8] sm:$0x7]
      %s732 = scalar_lea.vmem %s1, 128
      %v733 = vld [vmem:[%s732] sm:$0xff]
      %v734 = vld [vmem:[%s732 + $0x8] sm:$0xff]
      %v735 = vld [vmem:[%s732 + $0x10] sm:$0xff]
      %v736 = vld [vmem:[%s732 + $0x18] sm:$0xff]
      %v739 = vcombine.high %v730, %v730
      %740 = vrot.lane.b32.xlu0 %v730, 111
      %v741 = vpop.permute.xlu0 %740
      %742 = vrot.lane.b32.xlu0 %v739, 111
      %v743 = vpop.permute.xlu0 %742
      %744 = vrot.lane.b32.xlu0 %v731, 111
      %v745 = vpop.permute.xlu0 %744
      %vm746 = vcmask 908288
      %v747 = vsel %vm746, %v741, %v743
      %v748 = vsel %vm746, %v743, %v745
      %v750 = vsel %vm236, %v733, 0
      %v753 = vsel %vm236, %v734, 0
      %v756 = vsel %vm236, %v735, 0
      %v759 = vsel %vm236, %v736, 0
      %v761 = vsel %vm249, %v747, 0
      %v763 = vsel %vm249, %v748, 0
      %765 = vmatprep.subr.mxu0 0.0
      %766 = vmatpush1.msra.mxu0 0.0
      %767 = vmatprep.subr.mxu0 0.0
      %768 = vmatpush1.msra.mxu0 0.0
      %769 = vmatprep.subr.mxu0 0.0
      %770 = vmatpush1.msra.mxu0 0.0
      %771 = vmatprep.subr.mxu0 0.0
      %772 = vmatpush1.msra.mxu0 0.0
      %773 = vmatprep.subr.mxu0 0.0
      %774 = vmatpush1.msra.mxu0 0.0
      %775 = vmatprep.subr.mxu0 0.0
      %776 = vmatpush1.msra.mxu0 0.0
      %777 = vmatprep.subr.mxu0 0.0
      %778 = vmatpush1.msra.mxu0 0.0
      %779 = vmatprep.subr.mxu0 0.0
      %780 = vmatpush1.msra.mxu0 0.0
      %781 = vmatprep.subr.mxu0 0.0
      %782 = vmatpush1.msra.mxu0 0.0
      %783 = vmatprep.subr.mxu0 0.0
      %784 = vmatpush1.msra.mxu0 0.0
      %785 = vmatprep.subr.mxu0 0.0
      %786 = vmatpush1.msra.mxu0 0.0
      %787 = vmatprep.subr.mxu0 0.0
      %788 = vmatpush1.msra.mxu0 0.0
      %789 = vmatprep.subr.mxu0 0.0
      %790 = vmatpush1.msra.mxu0 0.0
      %791 = vmatprep.subr.mxu0 0.0
      %792 = vmatpush1.msra.mxu0 0.0
      %793 = vmatprep.subr.mxu0 0.0
      %794 = vmatpush1.msra.mxu0 0.0
      %795 = vmatprep.subr.mxu0 %v763
      %796 = vmatpush1.msra.mxu0 %v761
      %797 = vmatprep.subr.mxu0 0.0
      %798 = vmatpush2.msra.mxu0 0.0
      %799 = vmatprep.subr.mxu0 0.0
      %800 = vmatpush2.msra.mxu0 0.0
      %801 = vmatprep.subr.mxu0 0.0
      %802 = vmatpush2.msra.mxu0 0.0
      %803 = vmatprep.subr.mxu0 0.0
      %804 = vmatpush2.msra.mxu0 0.0
      %805 = vmatprep.subr.mxu0 0.0
      %806 = vmatpush2.msra.mxu0 0.0
      %807 = vmatprep.subr.mxu0 0.0
      %808 = vmatpush2.msra.mxu0 0.0
      %809 = vmatprep.subr.mxu0 0.0
      %810 = vmatpush2.msra.mxu0 0.0
      %811 = vmatprep.subr.mxu0 0.0
      %812 = vmatpush2.msra.mxu0 0.0
      %813 = vmatprep.subr.mxu0 0.0
      %814 = vmatpush2.msra.mxu0 0.0
      %815 = vmatprep.subr.mxu0 0.0
      %816 = vmatpush2.msra.mxu0 0.0
      %817 = vmatprep.subr.mxu0 0.0
      %818 = vmatpush2.msra.mxu0 0.0
      %819 = vmatprep.subr.mxu0 0.0
      %820 = vmatpush2.msra.mxu0 0.0
      %821 = vmatprep.subr.mxu0 0.0
      %822 = vmatpush2.msra.mxu0 0.0
      %823 = vmatprep.subr.mxu0 0.0
      %824 = vmatpush2.msra.mxu0 0.0
      %825 = vmatprep.subr.mxu0 0.0
      %826 = vmatpush2.msra.mxu0 0.0
      %827 = vmatprep.subr.mxu0 0.0
      %828 = vmatpush2.msra.mxu0 0.0
      %829 = vmatprep.mubr.f32.mxu0 0.0
      %830 = vmatmul.mubr.f32.gmra.mxu0 %v750
      %v831 = vpop.f32.mrf.mxu0
      %v832 = vadd.f32 0.0, %v831
      %v833 = vpop.f32.mrf.mxu0
      %v834 = vadd.f32 0.0, %v833
      %835 = vmatprep.mubr.f32.mxu0 0.0
      %836 = vmatmul.mubr.f32.gmra.mxu0 %v753
      %v837 = vpop.f32.mrf.mxu0
      %v838 = vadd.f32 0.0, %v837
      %v839 = vpop.f32.mrf.mxu0
      %v840 = vadd.f32 0.0, %v839
      %841 = vmatprep.mubr.f32.mxu0 0.0
      %842 = vmatmul.mubr.f32.gmra.mxu0 %v756
      %v843 = vpop.f32.mrf.mxu0
      %v844 = vadd.f32 0.0, %v843
      %v845 = vpop.f32.mrf.mxu0
      %v846 = vadd.f32 0.0, %v845
      %847 = vmatprep.mubr.f32.mxu0 0.0
      %848 = vmatmul.mubr.f32.gmra.mxu0 %v759
      %v849 = vpop.f32.mrf.mxu0
      %v850 = vadd.f32 0.0, %v849
      %v851 = vpop.f32.mrf.mxu0
      %v852 = vadd.f32 0.0, %v851
      %853 = vdwg.mxu0
      %v854 = vadd.f32 %v722, %v832
      %v855 = vadd.f32 %v723, %v834
      %v856 = vadd.f32 %v724, %v838
      %v857 = vadd.f32 %v725, %v840
      %v858 = vadd.f32 %v726, %v844
      %v859 = vadd.f32 %v727, %v846
      %v860 = vadd.f32 %v728, %v850
      %v861 = vadd.f32 %v729, %v852
      %v862 = vld [vmem:[%s165] sm:$0x77]
      %v863 = vld [vmem:[%s165 + $0x8] sm:$0x7]
      %v866 = vcombine.high %v862, %v862
      %867 = vrot.lane.b32.xlu0 %v862, 110
      %v868 = vpop.permute.xlu0 %867
      %869 = vrot.lane.b32.xlu0 %v866, 110
      %v870 = vpop.permute.xlu0 %869
      %871 = vrot.lane.b32.xlu0 %v863, 110
      %v872 = vpop.permute.xlu0 %871
      %vm873 = vcmask 900096
      %v874 = vsel %vm873, %v868, %v870
      %v875 = vsel %vm873, %v870, %v872
      %v878 = vsel %vm454, %v874, 0.0
      %v879 = vsel %vm455, %v875, 0.0
      %s880 = scalar_lea.vmem %s1, 160
      %v881 = vld [vmem:[%s880] sm:$0xff]
      %v882 = vld [vmem:[%s880 + $0x8] sm:$0xff]
      %v883 = vld [vmem:[%s880 + $0x10] sm:$0xff]
      %v884 = vld [vmem:[%s880 + $0x18] sm:$0xff]
      %v886 = vsel %vm236, %v881, 0
      %v889 = vsel %vm236, %v882, 0
      %v892 = vsel %vm236, %v883, 0
      %v895 = vsel %vm236, %v884, 0
      %v898 = vsel %vm249, %v878, 0
      %v901 = vsel %vm249, %v879, 0
      %903 = vmatprep.subr.mxu0 0.0
      %904 = vmatpush1.msra.mxu0 0.0
      %905 = vmatprep.subr.mxu0 0.0
      %906 = vmatpush1.msra.mxu0 0.0
      %907 = vmatprep.subr.mxu0 0.0
      %908 = vmatpush1.msra.mxu0 0.0
      %909 = vmatprep.subr.mxu0 0.0
      %910 = vmatpush1.msra.mxu0 0.0
      %911 = vmatprep.subr.mxu0 0.0
      %912 = vmatpush1.msra.mxu0 0.0
      %913 = vmatprep.subr.mxu0 0.0
      %914 = vmatpush1.msra.mxu0 0.0
      %915 = vmatprep.subr.mxu0 0.0
      %916 = vmatpush1.msra.mxu0 0.0
      %917 = vmatprep.subr.mxu0 0.0
      %918 = vmatpush1.msra.mxu0 0.0
      %919 = vmatprep.subr.mxu0 0.0
      %920 = vmatpush1.msra.mxu0 0.0
      %921 = vmatprep.subr.mxu0 0.0
      %922 = vmatpush1.msra.mxu0 0.0
      %923 = vmatprep.subr.mxu0 0.0
      %924 = vmatpush1.msra.mxu0 0.0
      %925 = vmatprep.subr.mxu0 0.0
      %926 = vmatpush1.msra.mxu0 0.0
      %927 = vmatprep.subr.mxu0 0.0
      %928 = vmatpush1.msra.mxu0 0.0
      %929 = vmatprep.subr.mxu0 0.0
      %930 = vmatpush1.msra.mxu0 0.0
      %931 = vmatprep.subr.mxu0 0.0
      %932 = vmatpush1.msra.mxu0 0.0
      %933 = vmatprep.subr.mxu0 %v901
      %934 = vmatpush1.msra.mxu0 %v898
      %935 = vmatprep.subr.mxu0 0.0
      %936 = vmatpush2.msra.mxu0 0.0
      %937 = vmatprep.subr.mxu0 0.0
      %938 = vmatpush2.msra.mxu0 0.0
      %939 = vmatprep.subr.mxu0 0.0
      %940 = vmatpush2.msra.mxu0 0.0
      %941 = vmatprep.subr.mxu0 0.0
      %942 = vmatpush2.msra.mxu0 0.0
      %943 = vmatprep.subr.mxu0 0.0
      %944 = vmatpush2.msra.mxu0 0.0
      %945 = vmatprep.subr.mxu0 0.0
      %946 = vmatpush2.msra.mxu0 0.0
      %947 = vmatprep.subr.mxu0 0.0
      %948 = vmatpush2.msra.mxu0 0.0
      %949 = vmatprep.subr.mxu0 0.0
      %950 = vmatpush2.msra.mxu0 0.0
      %951 = vmatprep.subr.mxu0 0.0
      %952 = vmatpush2.msra.mxu0 0.0
      %953 = vmatprep.subr.mxu0 0.0
      %954 = vmatpush2.msra.mxu0 0.0
      %955 = vmatprep.subr.mxu0 0.0
      %956 = vmatpush2.msra.mxu0 0.0
      %957 = vmatprep.subr.mxu0 0.0
      %958 = vmatpush2.msra.mxu0 0.0
      %959 = vmatprep.subr.mxu0 0.0
      %960 = vmatpush2.msra.mxu0 0.0
      %961 = vmatprep.subr.mxu0 0.0
      %962 = vmatpush2.msra.mxu0 0.0
      %963 = vmatprep.subr.mxu0 0.0
      %964 = vmatpush2.msra.mxu0 0.0
      %965 = vmatprep.subr.mxu0 0.0
      %966 = vmatpush2.msra.mxu0 0.0
      %967 = vmatprep.mubr.f32.mxu0 0.0
      %968 = vmatmul.mubr.f32.gmra.mxu0 %v886
      %v969 = vpop.f32.mrf.mxu0
      %v970 = vadd.f32 0.0, %v969
      %v971 = vpop.f32.mrf.mxu0
      %v972 = vadd.f32 0.0, %v971
      %973 = vmatprep.mubr.f32.mxu0 0.0
      %974 = vmatmul.mubr.f32.gmra.mxu0 %v889
      %v975 = vpop.f32.mrf.mxu0
      %v976 = vadd.f32 0.0, %v975
      %v977 = vpop.f32.mrf.mxu0
      %v978 = vadd.f32 0.0, %v977
      %979 = vmatprep.mubr.f32.mxu0 0.0
      %980 = vmatmul.mubr.f32.gmra.mxu0 %v892
      %v981 = vpop.f32.mrf.mxu0
      %v982 = vadd.f32 0.0, %v981
      %v983 = vpop.f32.mrf.mxu0
      %v984 = vadd.f32 0.0, %v983
      %985 = vmatprep.mubr.f32.mxu0 0.0
      %986 = vmatmul.mubr.f32.gmra.mxu0 %v895
      %v987 = vpop.f32.mrf.mxu0
      %v988 = vadd.f32 0.0, %v987
      %v989 = vpop.f32.mrf.mxu0
      %v990 = vadd.f32 0.0, %v989
      %991 = vdwg.mxu0
      %v992 = vadd.f32 %v854, %v970
      %v993 = vadd.f32 %v855, %v972
      %v994 = vadd.f32 %v856, %v976
      %v995 = vadd.f32 %v857, %v978
      %v996 = vadd.f32 %v858, %v982
      %v997 = vadd.f32 %v859, %v984
      %v998 = vadd.f32 %v860, %v988
      %v999 = vadd.f32 %v861, %v990
      %v1000 = vld [vmem:[%s165] sm:$0x77]
      %v1001 = vld [vmem:[%s165 + $0x8] sm:$0x7]
      %v1004 = vcombine.high %v1000, %v1000
      %1005 = vrot.lane.b32.xlu0 %v1000, 96
      %v1006 = vpop.permute.xlu0 %1005
      %1007 = vrot.lane.b32.xlu0 %v1004, 96
      %v1008 = vpop.permute.xlu0 %1007
      %1009 = vrot.lane.b32.xlu0 %v1001, 96
      %v1010 = vpop.permute.xlu0 %1009
      %vm1011 = vcmask 785408
      %v1012 = vsel %vm1011, %v1006, %v1008
      %v1013 = vsel %vm1011, %v1008, %v1010
      %v1016 = vsel %vm209, %v1012, 0.0
      %v1017 = vsel %vm210, %v1013, 0.0
      %s1018 = scalar_lea.vmem %s1, 192
      %v1019 = vld [vmem:[%s1018] sm:$0xff]
      %v1020 = vld [vmem:[%s1018 + $0x8] sm:$0xff]
      %v1021 = vld [vmem:[%s1018 + $0x10] sm:$0xff]
      %v1022 = vld [vmem:[%s1018 + $0x18] sm:$0xff]
      %v1024 = vsel %vm236, %v1019, 0
      %v1027 = vsel %vm236, %v1020, 0
      %v1030 = vsel %vm236, %v1021, 0
      %v1033 = vsel %vm236, %v1022, 0
      %v1036 = vsel %vm249, %v1016, 0
      %v1039 = vsel %vm249, %v1017, 0
      %1041 = vmatprep.subr.mxu0 0.0
      %1042 = vmatpush1.msra.mxu0 0.0
      %1043 = vmatprep.subr.mxu0 0.0
      %1044 = vmatpush1.msra.mxu0 0.0
      %1045 = vmatprep.subr.mxu0 0.0
      %1046 = vmatpush1.msra.mxu0 0.0
      %1047 = vmatprep.subr.mxu0 0.0
      %1048 = vmatpush1.msra.mxu0 0.0
      %1049 = vmatprep.subr.mxu0 0.0
      %1050 = vmatpush1.msra.mxu0 0.0
      %1051 = vmatprep.subr.mxu0 0.0
      %1052 = vmatpush1.msra.mxu0 0.0
      %1053 = vmatprep.subr.mxu0 0.0
      %1054 = vmatpush1.msra.mxu0 0.0
      %1055 = vmatprep.subr.mxu0 0.0
      %1056 = vmatpush1.msra.mxu0 0.0
      %1057 = vmatprep.subr.mxu0 0.0
      %1058 = vmatpush1.msra.mxu0 0.0
      %1059 = vmatprep.subr.mxu0 0.0
      %1060 = vmatpush1.msra.mxu0 0.0
      %1061 = vmatprep.subr.mxu0 0.0
      %1062 = vmatpush1.msra.mxu0 0.0
      %1063 = vmatprep.subr.mxu0 0.0
      %1064 = vmatpush1.msra.mxu0 0.0
      %1065 = vmatprep.subr.mxu0 0.0
      %1066 = vmatpush1.msra.mxu0 0.0
      %1067 = vmatprep.subr.mxu0 0.0
      %1068 = vmatpush1.msra.mxu0 0.0
      %1069 = vmatprep.subr.mxu0 0.0
      %1070 = vmatpush1.msra.mxu0 0.0
      %1071 = vmatprep.subr.mxu0 %v1039
      %1072 = vmatpush1.msra.mxu0 %v1036
      %1073 = vmatprep.subr.mxu0 0.0
      %1074 = vmatpush2.msra.mxu0 0.0
      %1075 = vmatprep.subr.mxu0 0.0
      %1076 = vmatpush2.msra.mxu0 0.0
      %1077 = vmatprep.subr.mxu0 0.0
      %1078 = vmatpush2.msra.mxu0 0.0
      %1079 = vmatprep.subr.mxu0 0.0
      %1080 = vmatpush2.msra.mxu0 0.0
      %1081 = vmatprep.subr.mxu0 0.0
      %1082 = vmatpush2.msra.mxu0 0.0
      %1083 = vmatprep.subr.mxu0 0.0
      %1084 = vmatpush2.msra.mxu0 0.0
      %1085 = vmatprep.subr.mxu0 0.0
      %1086 = vmatpush2.msra.mxu0 0.0
      %1087 = vmatprep.subr.mxu0 0.0
      %1088 = vmatpush2.msra.mxu0 0.0
      %1089 = vmatprep.subr.mxu0 0.0
      %1090 = vmatpush2.msra.mxu0 0.0
      %1091 = vmatprep.subr.mxu0 0.0
      %1092 = vmatpush2.msra.mxu0 0.0
      %1093 = vmatprep.subr.mxu0 0.0
      %1094 = vmatpush2.msra.mxu0 0.0
      %1095 = vmatprep.subr.mxu0 0.0
      %1096 = vmatpush2.msra.mxu0 0.0
      %1097 = vmatprep.subr.mxu0 0.0
      %1098 = vmatpush2.msra.mxu0 0.0
      %1099 = vmatprep.subr.mxu0 0.0
      %1100 = vmatpush2.msra.mxu0 0.0
      %1101 = vmatprep.subr.mxu0 0.0
      %1102 = vmatpush2.msra.mxu0 0.0
      %1103 = vmatprep.subr.mxu0 0.0
      %1104 = vmatpush2.msra.mxu0 0.0
      %1105 = vmatprep.mubr.f32.mxu0 0.0
      %1106 = vmatmul.mubr.f32.gmra.mxu0 %v1024
      %v1107 = vpop.f32.mrf.mxu0
      %v1108 = vadd.f32 0.0, %v1107
      %v1109 = vpop.f32.mrf.mxu0
      %v1110 = vadd.f32 0.0, %v1109
      %1111 = vmatprep.mubr.f32.mxu0 0.0
      %1112 = vmatmul.mubr.f32.gmra.mxu0 %v1027
      %v1113 = vpop.f32.mrf.mxu0
      %v1114 = vadd.f32 0.0, %v1113
      %v1115 = vpop.f32.mrf.mxu0
      %v1116 = vadd.f32 0.0, %v1115
      %1117 = vmatprep.mubr.f32.mxu0 0.0
      %1118 = vmatmul.mubr.f32.gmra.mxu0 %v1030
      %v1119 = vpop.f32.mrf.mxu0
      %v1120 = vadd.f32 0.0, %v1119
      %v1121 = vpop.f32.mrf.mxu0
      %v1122 = vadd.f32 0.0, %v1121
      %1123 = vmatprep.mubr.f32.mxu0 0.0
      %1124 = vmatmul.mubr.f32.gmra.mxu0 %v1033
      %v1125 = vpop.f32.mrf.mxu0
      %v1126 = vadd.f32 0.0, %v1125
      %v1127 = vpop.f32.mrf.mxu0
      %v1128 = vadd.f32 0.0, %v1127
      %1129 = vdwg.mxu0
      %v1130 = vadd.f32 %v992, %v1108
      %v1131 = vadd.f32 %v993, %v1110
      %v1132 = vadd.f32 %v994, %v1114
      %v1133 = vadd.f32 %v995, %v1116
      %v1134 = vadd.f32 %v996, %v1120
      %v1135 = vadd.f32 %v997, %v1122
      %v1136 = vadd.f32 %v998, %v1126
      %v1137 = vadd.f32 %v999, %v1128
      %v1138 = vld [vmem:[%s165] sm:$0x77]
      %v1139 = vld [vmem:[%s165 + $0x8] sm:$0x7]
      %s1140 = scalar_lea.vmem %s1, 224
      %v1141 = vld [vmem:[%s1140] sm:$0xff]
      %v1142 = vld [vmem:[%s1140 + $0x8] sm:$0xff]
      %v1143 = vld [vmem:[%s1140 + $0x10] sm:$0xff]
      %v1144 = vld [vmem:[%s1140 + $0x18] sm:$0xff]
      %v1147 = vcombine.high %v1138, %v1138
      %1148 = vrot.lane.b32.xlu0 %v1138, 95
      %v1149 = vpop.permute.xlu0 %1148
      %1150 = vrot.lane.b32.xlu0 %v1147, 95
      %v1151 = vpop.permute.xlu0 %1150
      %1152 = vrot.lane.b32.xlu0 %v1139, 95
      %v1153 = vpop.permute.xlu0 %1152
      %vm1154 = vcmask 777216
      %v1155 = vsel %vm1154, %v1149, %v1151
      %v1156 = vsel %vm1154, %v1151, %v1153
      %v1158 = vsel %vm236, %v1141, 0
      %v1161 = vsel %vm236, %v1142, 0
      %v1164 = vsel %vm236, %v1143, 0
      %v1167 = vsel %vm236, %v1144, 0
      %v1169 = vsel %vm249, %v1155, 0
      %v1171 = vsel %vm249, %v1156, 0
      %1173 = vmatprep.subr.mxu0 0.0
      %1174 = vmatpush1.msra.mxu0 0.0
      %1175 = vmatprep.subr.mxu0 0.0
      %1176 = vmatpush1.msra.mxu0 0.0
      %1177 = vmatprep.subr.mxu0 0.0
      %1178 = vmatpush1.msra.mxu0 0.0
      %1179 = vmatprep.subr.mxu0 0.0
      %1180 = vmatpush1.msra.mxu0 0.0
      %1181 = vmatprep.subr.mxu0 0.0
      %1182 = vmatpush1.msra.mxu0 0.0
      %1183 = vmatprep.subr.mxu0 0.0
      %1184 = vmatpush1.msra.mxu0 0.0
      %1185 = vmatprep.subr.mxu0 0.0
      %1186 = vmatpush1.msra.mxu0 0.0
      %1187 = vmatprep.subr.mxu0 0.0
      %1188 = vmatpush1.msra.mxu0 0.0
      %1189 = vmatprep.subr.mxu0 0.0
      %1190 = vmatpush1.msra.mxu0 0.0
      %1191 = vmatprep.subr.mxu0 0.0
      %1192 = vmatpush1.msra.mxu0 0.0
      %1193 = vmatprep.subr.mxu0 0.0
      %1194 = vmatpush1.msra.mxu0 0.0
      %1195 = vmatprep.subr.mxu0 0.0
      %1196 = vmatpush1.msra.mxu0 0.0
      %1197 = vmatprep.subr.mxu0 0.0
      %1198 = vmatpush1.msra.mxu0 0.0
      %1199 = vmatprep.subr.mxu0 0.0
      %1200 = vmatpush1.msra.mxu0 0.0
      %1201 = vmatprep.subr.mxu0 0.0
      %1202 = vmatpush1.msra.mxu0 0.0
      %1203 = vmatprep.subr.mxu0 %v1171
      %1204 = vmatpush1.msra.mxu0 %v1169
      %1205 = vmatprep.subr.mxu0 0.0
      %1206 = vmatpush2.msra.mxu0 0.0
      %1207 = vmatprep.subr.mxu0 0.0
      %1208 = vmatpush2.msra.mxu0 0.0
      %1209 = vmatprep.subr.mxu0 0.0
      %1210 = vmatpush2.msra.mxu0 0.0
      %1211 = vmatprep.subr.mxu0 0.0
      %1212 = vmatpush2.msra.mxu0 0.0
      %1213 = vmatprep.subr.mxu0 0.0
      %1214 = vmatpush2.msra.mxu0 0.0
      %1215 = vmatprep.subr.mxu0 0.0
      %1216 = vmatpush2.msra.mxu0 0.0
      %1217 = vmatprep.subr.mxu0 0.0
      %1218 = vmatpush2.msra.mxu0 0.0
      %1219 = vmatprep.subr.mxu0 0.0
      %1220 = vmatpush2.msra.mxu0 0.0
      %1221 = vmatprep.subr.mxu0 0.0
      %1222 = vmatpush2.msra.mxu0 0.0
      %1223 = vmatprep.subr.mxu0 0.0
      %1224 = vmatpush2.msra.mxu0 0.0
      %1225 = vmatprep.subr.mxu0 0.0
      %1226 = vmatpush2.msra.mxu0 0.0
      %1227 = vmatprep.subr.mxu0 0.0
      %1228 = vmatpush2.msra.mxu0 0.0
      %1229 = vmatprep.subr.mxu0 0.0
      %1230 = vmatpush2.msra.mxu0 0.0
      %1231 = vmatprep.subr.mxu0 0.0
      %1232 = vmatpush2.msra.mxu0 0.0
      %1233 = vmatprep.subr.mxu0 0.0
      %1234 = vmatpush2.msra.mxu0 0.0
      %1235 = vmatprep.subr.mxu0 0.0
      %1236 = vmatpush2.msra.mxu0 0.0
      %1237 = vmatprep.mubr.f32.mxu0 0.0
      %1238 = vmatmul.mubr.f32.gmra.mxu0 %v1158
      %v1239 = vpop.f32.mrf.mxu0
      %v1240 = vadd.f32 0.0, %v1239
      %v1241 = vpop.f32.mrf.mxu0
      %v1242 = vadd.f32 0.0, %v1241
      %1243 = vmatprep.mubr.f32.mxu0 0.0
      %1244 = vmatmul.mubr.f32.gmra.mxu0 %v1161
      %v1245 = vpop.f32.mrf.mxu0
      %v1246 = vadd.f32 0.0, %v1245
      %v1247 = vpop.f32.mrf.mxu0
      %v1248 = vadd.f32 0.0, %v1247
      %1249 = vmatprep.mubr.f32.mxu0 0.0
      %1250 = vmatmul.mubr.f32.gmra.mxu0 %v1164
      %v1251 = vpop.f32.mrf.mxu0
      %v1252 = vadd.f32 0.0, %v1251
      %v1253 = vpop.f32.mrf.mxu0
      %v1254 = vadd.f32 0.0, %v1253
      %1255 = vmatprep.mubr.f32.mxu0 0.0
      %1256 = vmatmul.mubr.f32.gmra.mxu0 %v1167
      %v1257 = vpop.f32.mrf.mxu0
      %v1258 = vadd.f32 0.0, %v1257
      %v1259 = vpop.f32.mrf.mxu0
      %v1260 = vadd.f32 0.0, %v1259
      %1261 = vdwg.mxu0
      %v1262 = vadd.f32 %v1130, %v1240
      %v1263 = vadd.f32 %v1131, %v1242
      %v1264 = vadd.f32 %v1132, %v1246
      %v1265 = vadd.f32 %v1133, %v1248
      %v1266 = vadd.f32 %v1134, %v1252
      %v1267 = vadd.f32 %v1135, %v1254
      %v1268 = vadd.f32 %v1136, %v1258
      %v1269 = vadd.f32 %v1137, %v1260
      %v1270 = vld [vmem:[%s165] sm:$0x77]
      %v1271 = vld [vmem:[%s165 + $0x8] sm:$0x7]
      %v1274 = vcombine.high %v1270, %v1270
      %1275 = vrot.lane.b32.xlu0 %v1270, 94
      %v1276 = vpop.permute.xlu0 %1275
      %1277 = vrot.lane.b32.xlu0 %v1274, 94
      %v1278 = vpop.permute.xlu0 %1277
      %1279 = vrot.lane.b32.xlu0 %v1271, 94
      %v1280 = vpop.permute.xlu0 %1279
      %vm1281 = vcmask 769024
      %v1282 = vsel %vm1281, %v1276, %v1278
      %v1283 = vsel %vm1281, %v1278, %v1280
      %v1286 = vsel %vm454, %v1282, 0.0
      %v1287 = vsel %vm455, %v1283, 0.0
      %s1288 = scalar_lea.vmem %s1, 256
      %v1289 = vld [vmem:[%s1288] sm:$0xff]
      %v1290 = vld [vmem:[%s1288 + $0x8] sm:$0xff]
      %v1291 = vld [vmem:[%s1288 + $0x10] sm:$0xff]
      %v1292 = vld [vmem:[%s1288 + $0x18] sm:$0xff]
      %v1294 = vsel %vm236, %v1289, 0
      %v1297 = vsel %vm236, %v1290, 0
      %v1300 = vsel %vm236, %v1291, 0
      %v1303 = vsel %vm236, %v1292, 0
      %v1306 = vsel %vm249, %v1286, 0
      %v1309 = vsel %vm249, %v1287, 0
      %1311 = vmatprep.subr.mxu0 0.0
      %1312 = vmatpush1.msra.mxu0 0.0
      %1313 = vmatprep.subr.mxu0 0.0
      %1314 = vmatpush1.msra.mxu0 0.0
      %1315 = vmatprep.subr.mxu0 0.0
      %1316 = vmatpush1.msra.mxu0 0.0
      %1317 = vmatprep.subr.mxu0 0.0
      %1318 = vmatpush1.msra.mxu0 0.0
      %1319 = vmatprep.subr.mxu0 0.0
      %1320 = vmatpush1.msra.mxu0 0.0
      %1321 = vmatprep.subr.mxu0 0.0
      %1322 = vmatpush1.msra.mxu0 0.0
      %1323 = vmatprep.subr.mxu0 0.0
      %1324 = vmatpush1.msra.mxu0 0.0
      %1325 = vmatprep.subr.mxu0 0.0
      %1326 = vmatpush1.msra.mxu0 0.0
      %1327 = vmatprep.subr.mxu0 0.0
      %1328 = vmatpush1.msra.mxu0 0.0
      %1329 = vmatprep.subr.mxu0 0.0
      %1330 = vmatpush1.msra.mxu0 0.0
      %1331 = vmatprep.subr.mxu0 0.0
      %1332 = vmatpush1.msra.mxu0 0.0
      %1333 = vmatprep.subr.mxu0 0.0
      %1334 = vmatpush1.msra.mxu0 0.0
      %1335 = vmatprep.subr.mxu0 0.0
      %1336 = vmatpush1.msra.mxu0 0.0
      %1337 = vmatprep.subr.mxu0 0.0
      %1338 = vmatpush1.msra.mxu0 0.0
      %1339 = vmatprep.subr.mxu0 0.0
      %1340 = vmatpush1.msra.mxu0 0.0
      %1341 = vmatprep.subr.mxu0 %v1309
      %1342 = vmatpush1.msra.mxu0 %v1306
      %1343 = vmatprep.subr.mxu0 0.0
      %1344 = vmatpush2.msra.mxu0 0.0
      %1345 = vmatprep.subr.mxu0 0.0
      %1346 = vmatpush2.msra.mxu0 0.0
      %1347 = vmatprep.subr.mxu0 0.0
      %1348 = vmatpush2.msra.mxu0 0.0
      %1349 = vmatprep.subr.mxu0 0.0
      %1350 = vmatpush2.msra.mxu0 0.0
      %1351 = vmatprep.subr.mxu0 0.0
      %1352 = vmatpush2.msra.mxu0 0.0
      %1353 = vmatprep.subr.mxu0 0.0
      %1354 = vmatpush2.msra.mxu0 0.0
      %1355 = vmatprep.subr.mxu0 0.0
      %1356 = vmatpush2.msra.mxu0 0.0
      %1357 = vmatprep.subr.mxu0 0.0
      %1358 = vmatpush2.msra.mxu0 0.0
      %1359 = vmatprep.subr.mxu0 0.0
      %1360 = vmatpush2.msra.mxu0 0.0
      %1361 = vmatprep.subr.mxu0 0.0
      %1362 = vmatpush2.msra.mxu0 0.0
      %1363 = vmatprep.subr.mxu0 0.0
      %1364 = vmatpush2.msra.mxu0 0.0
      %1365 = vmatprep.subr.mxu0 0.0
      %1366 = vmatpush2.msra.mxu0 0.0
      %1367 = vmatprep.subr.mxu0 0.0
      %1368 = vmatpush2.msra.mxu0 0.0
      %1369 = vmatprep.subr.mxu0 0.0
      %1370 = vmatpush2.msra.mxu0 0.0
      %1371 = vmatprep.subr.mxu0 0.0
      %1372 = vmatpush2.msra.mxu0 0.0
      %1373 = vmatprep.subr.mxu0 0.0
      %1374 = vmatpush2.msra.mxu0 0.0
      %1375 = vmatprep.mubr.f32.mxu0 0.0
      %1376 = vmatmul.mubr.f32.gmra.mxu0 %v1294
      %v1377 = vpop.f32.mrf.mxu0
      %v1378 = vadd.f32 0.0, %v1377
      %v1379 = vpop.f32.mrf.mxu0
      %v1380 = vadd.f32 0.0, %v1379
      %1381 = vmatprep.mubr.f32.mxu0 0.0
      %1382 = vmatmul.mubr.f32.gmra.mxu0 %v1297
      %v1383 = vpop.f32.mrf.mxu0
      %v1384 = vadd.f32 0.0, %v1383
      %v1385 = vpop.f32.mrf.mxu0
      %v1386 = vadd.f32 0.0, %v1385
      %1387 = vmatprep.mubr.f32.mxu0 0.0
      %1388 = vmatmul.mubr.f32.gmra.mxu0 %v1300
      %v1389 = vpop.f32.mrf.mxu0
      %v1390 = vadd.f32 0.0, %v1389
      %v1391 = vpop.f32.mrf.mxu0
      %v1392 = vadd.f32 0.0, %v1391
      %1393 = vmatprep.mubr.f32.mxu0 0.0
      %1394 = vmatmul.mubr.f32.gmra.mxu0 %v1303
      %v1395 = vpop.f32.mrf.mxu0
      %v1396 = vadd.f32 0.0, %v1395
      %v1397 = vpop.f32.mrf.mxu0
      %v1398 = vadd.f32 0.0, %v1397
      %1399 = vdwg.mxu0
      %v1400 = vadd.f32 %v1262, %v1378
      %v1401 = vadd.f32 %v1263, %v1380
      %v1402 = vadd.f32 %v1264, %v1384
      %v1403 = vadd.f32 %v1265, %v1386
      %v1404 = vadd.f32 %v1266, %v1390
      %v1405 = vadd.f32 %v1267, %v1392
      %v1406 = vadd.f32 %v1268, %v1396
      %v1407 = vadd.f32 %v1269, %v1398
      %1409 = vset.pattern.permute.xlu0 0
      %1410 = vperm.xlu0 %1409, %v202
      %v1411 = vpop.permute.xlu0 %1410
      %1414 = vset.pattern.permute.xlu0 0
      %1415 = vperm.xlu0 %1414, %v203
      %v1416 = vpop.permute.xlu0 %1415
      %1419 = vset.pattern.permute.xlu0 0
      %1420 = vperm.xlu0 %1419, %v204
      %v1421 = vpop.permute.xlu0 %1420
      %1424 = vset.pattern.permute.xlu0 0
      %1425 = vperm.xlu0 %1424, %v205
      %v1426 = vpop.permute.xlu0 %1425
      %v1428 = vadd.f32 %v1400, %v1411
      %v1429 = vadd.f32 %v1401, %v1411
      %v1430 = vadd.f32 %v1402, %v1416
      %v1431 = vadd.f32 %v1403, %v1416
      %v1432 = vadd.f32 %v1404, %v1421
      %v1433 = vadd.f32 %v1405, %v1421
      %v1434 = vadd.f32 %v1406, %v1426
      %v1435 = vadd.f32 %v1407, %v1426
      %v1436 = vmax.f32 %v1428, 0.0
      %v1437 = vmax.f32 %v1429, 0.0
      %v1438 = vmax.f32 %v1430, 0.0
      %v1439 = vmax.f32 %v1431, 0.0
      %v1440 = vmax.f32 %v1432, 0.0
      %v1441 = vmax.f32 %v1433, 0.0
      %v1442 = vmax.f32 %v1434, 0.0
      %v1443 = vmax.f32 %v1435, 0.0
      %1444 = vst [vmem:[%s170] sm:$0xff] %v1436
      %1445 = vst [vmem:[%s170 + $0x8] sm:$0xff] %v1437
      %1446 = vst [vmem:[%s170 + $0x10] sm:$0xff] %v1438
      %1447 = vst [vmem:[%s170 + $0x18] sm:$0xff] %v1439
      %1448 = vst [vmem:[%s170 + $0x20] sm:$0xff] %v1440
      %1449 = vst [vmem:[%s170 + $0x28] sm:$0xff] %v1441
      %1450 = vst [vmem:[%s170 + $0x30] sm:$0xff] %v1442
      %1451 = vst [vmem:[%s170 + $0x38] sm:$0xff] %v1443
      %p1452 = scmp.lt.s32.totalorder %s14, 1
      %s1453 = scalar_select %p1452, %s14, 1
      %s1454 = smul.addr %s1453, 8
      %s1455 = smul.addr %s1454, 8
      %s1456 = scalar_lea.vmem %s3, %s1455
      // Predicated region
      $region33: #{cnn_embed_forward.1} parent=31 // pred_check
        %p1457 = pneg %p100
      $region34: #{cnn_embed_forward.1} parent=31 // pred_check_branch
        %1459 = sbr.rel (%p1457) target = $region36
      $region35: #{cnn_embed_forward.1} parent=31 // pred_region
        _
      $region36: #{cnn_embed_forward.1} parent=31 // pred_fallthru
        _
    $region32: #{cnn_embed_forward.1} parent=5 // pred_fallthru
      _
    %p1460 = scmp.le.s32.totalorder 2, %s9
    // Predicated region
    $region37: #{cnn_embed_forward.1} parent=5 // pred_check
      %p1461 = pneg %p1460
    $region38: #{cnn_embed_forward.1} parent=5 // pred_check_branch
      %1463 = sbr.rel (%p1461) target = $region40
    $region39: #{cnn_embed_forward.1} parent=5 // pred_region
      %s1464 = ssub.s32 %s9, 2
      // Predicated region
      $region41: #{cnn_embed_forward.1} parent=39 // pred_check
        %p1465 = pneg %p106
      $region42: #{cnn_embed_forward.1} parent=39 // pred_check_branch
        %1467 = sbr.rel (%p1465) target = $region44
      $region43: #{cnn_embed_forward.1} parent=39 // pred_region
        %p1468 = scmp.lt.s32.totalorder %s15, 1
        %s1469 = scalar_select %p1468, %s15, 1
        %s1470 = smul.addr %s1469, 8
        %s1471 = smul.addr %s1470, 8
        %s1472 = scalar_lea.vmem %s3, %s1471
      $region44: #{cnn_embed_forward.1} parent=39 // pred_fallthru
        _
    $region40: #{cnn_embed_forward.1} parent=5 // pred_fallthru
      _
  $region6: #{cnn_embed_forward.1} parent=0 // loop_footer
    %s13 = sadd.s32 1, %s9
  $region7: #{cnn_embed_forward.1} parent=0 // loop_footer_branch
    %8 = sbr.rel target = $region3
  $region8: #{cnn_embed_forward.1} parent=0 // loop_exit
    _

</llo_original>
